<compile_context>
chip_gen: v6e
topology: v6e:2x2x1
jax: 0.10.0
libtpu: 0.0.40
codegen_flags: <defaults>
</compile_context>

<pallas_src>
import functools

import jax
import jax.numpy as jnp
from jax import lax
from jax.experimental import pallas as pl
from jax.experimental.pallas import tpu as pltpu


# -----------------------------------------------------------------------------
# Fused kernel: 4-phase transposed conv (MXU) + BatchNorm2d (batch stats) + ReLU
# -----------------------------------------------------------------------------
def _fused_convtrans_bn_relu_kernel(x_ref, w_ref, gb_ref, o_ref, *,
                                    eps, inv_count, c_out):
    # x_ref:  (4*C_in, M)          phase-shifted input taps, M = N*H*W on lanes
    # w_ref:  (4*C_out, 4*C_in)    per-phase packed ConvTranspose taps (p-major)
    # gb_ref: (2*C_out, 1)         [gamma; beta]
    # o_ref:  (4*C_out, M)         per-phase output (interleaved in the wrapper)
    x = x_ref[...]
    w = w_ref[...]

    # Whole contraction (K = 4 taps * C_in = 16) in one MXU matmul, f32 accum.
    y = jnp.dot(w, x, preferred_element_type=jnp.float32,
                precision=lax.Precision.HIGHEST)          # (4*C_out, M)

    # Per-phase row blocks; C_out == 8 -> aligned sublane-tile slices (free).
    ph = [y[p * c_out:(p + 1) * c_out, :] for p in range(4)]

    # Fused BatchNorm2d (training-mode batch statistics, biased variance)+ReLU.
    # Single-pass E[x^2]-mean^2 is fine at this size/tolerance; switch to a
    # shifted/two-pass variance when scaling up (cancellation risk).
    ps1 = ph[0] + ph[1] + ph[2] + ph[3]                               # (C_out, M)
    ps2 = ph[0] * ph[0] + ph[1] * ph[1] + ph[2] * ph[2] + ph[3] * ph[3]
    mean = jnp.sum(ps1, axis=1, keepdims=True) * inv_count            # (C_out, 1)
    ex2 = jnp.sum(ps2, axis=1, keepdims=True) * inv_count
    var = ex2 - mean * mean
    inv_std = lax.rsqrt(var + eps)                                    # EUP slot
    scale = gb_ref[0:c_out, :] * inv_std                              # gamma/std
    shift = gb_ref[c_out:2 * c_out, :] - mean * scale                 # beta - m*s

    # Lane-dense (M-wide) stores, one aligned (C_out, M) tile per phase.
    for p in range(4):
        o_ref[p * c_out:(p + 1) * c_out, :] = jnp.maximum(
            ph[p] * scale + shift, 0.0)


# -----------------------------------------------------------------------------
# Wrapper: layout plumbing (tap extraction, weight packing, phase interleave)
# -----------------------------------------------------------------------------
def conv_trans2d_forward(x_nchw, weight, bias, gamma, beta, eps=1e-5):
    """ConvTranspose2d(3, s=2, p=1, op=1) -> BatchNorm2d (batch stats) -> ReLU.

    x_nchw: (N, C_in, H, W); weight: (C_in, C_out, 3, 3) (torch layout).
    `bias` is accepted but unused: a constant per-channel bias cancels exactly
    under training-mode BatchNorm (would need re-applying for eval-mode BN).
    """
    del bias
    N, C_in, H, W = x_nchw.shape
    C_out = weight.shape[1]
    OH, OW = 2 * H, 2 * W
    M = N * H * W

    # Neighbour taps x[i,j], x[i,j+1], x[i+1,j], x[i+1,j+1] with zero padding at
    # the bottom/right edge.  Transpose the small input once, then pad/slice/
    # concat -- no transpose of the 4x-duplicated tap buffer.
    xt = jnp.transpose(x_nchw.astype(jnp.float32), (1, 0, 2, 3))   # (C_in,N,H,W)
    xp = jnp.pad(xt, ((0, 0), (0, 0), (0, 1), (0, 1)))
    taps = [xp[:, :, :H, :W], xp[:, :, :H, 1:W + 1],
            xp[:, :, 1:H + 1, :W], xp[:, :, 1:H + 1, 1:W + 1]]
    x_cat = jnp.concatenate(taps, axis=0).reshape(4 * C_in, M)      # (4*C_in, M)

    # Pack the ConvTranspose2d taps per output-parity phase (py, px):
    #   out[2i+py, 2j+px, co] = sum over that phase's taps of x_tap[ci]*w[ci,co,ky,kx]
    wt = jnp.transpose(weight.astype(jnp.float32), (1, 0, 2, 3))    # (Co,Ci,3,3)
    z = jnp.zeros((C_out, C_in), jnp.float32)
    t = lambda ky, kx: wt[:, :, ky, kx]                             # (C_out, C_in)
    phase_rows = [                                  # tap order: x00,x01,x10,x11
        [t(1, 1), z,       z,       z      ],      # (even row, even col)
        [t(1, 2), t(1, 0), z,       z      ],      # (even row, odd  col)
        [t(2, 1), z,       t(0, 1), z      ],      # (odd  row, even col)
        [t(2, 2), t(2, 0), t(0, 2), t(0, 0)],      # (odd  row, odd  col)
    ]
    w2d = jnp.stack([jnp.concatenate(r, axis=1) for r in phase_rows],
                    axis=0).reshape(4 * C_out, 4 * C_in)            # p-major rows

    gb = jnp.concatenate([gamma.astype(jnp.float32).reshape(C_out, 1),
                          beta.astype(jnp.float32).reshape(C_out, 1)], axis=0)

    out_flat = pl.pallas_call(
        functools.partial(_fused_convtrans_bn_relu_kernel, eps=eps,
                          inv_count=1.0 / float(N * OH * OW), c_out=C_out),
        out_shape=jax.ShapeDtypeStruct((4 * C_out, M), jnp.float32),
        grid=(1,),
        in_specs=[
            pl.BlockSpec((4 * C_in, M), lambda i: (0, 0)),
            pl.BlockSpec((4 * C_out, 4 * C_in), lambda i: (0, 0)),
            pl.BlockSpec((2 * C_out, 1), lambda i: (0, 0)),
        ],
        out_specs=pl.BlockSpec((4 * C_out, M), lambda i: (0, 0)),
        compiler_params=pltpu.CompilerParams(
            dimension_semantics=("arbitrary",),
            vmem_limit_bytes=16 * 1024 * 1024,
            allow_input_fusion=[True, True, True],
        ),
    )(x_cat, w2d, gb)

    # Interleave the four parity phases back to NCHW -- one XLA transpose fusion
    # (cheaper than an in-kernel lane->sublane relayout at this size).
    y = out_flat.reshape(2, 2, C_out, N, H, W)          # (py, px, co, n, i, j)
    y = jnp.transpose(y, (3, 2, 4, 0, 5, 1)).reshape(N, C_out, OH, OW)
    return y


# -----------------------------------------------------------------------------
# Pure-JAX reference (independent path via lhs-dilated conv) for self-check
# -----------------------------------------------------------------------------
def _reference(x, weight, bias, gamma, beta, eps=1e-5):
    k = jnp.transpose(weight[:, :, ::-1, ::-1], (1, 0, 2, 3))   # OIHW, flipped
    y = lax.conv_general_dilated(
        x, k, window_strides=(1, 1), padding=((1, 2), (1, 2)),
        lhs_dilation=(2, 2), rhs_dilation=(1, 1),
        dimension_numbers=("NCHW", "OIHW", "NCHW"),
        precision=lax.Precision.HIGHEST)
    y = y + bias[None, :, None, None]
    mean = jnp.mean(y, axis=(0, 2, 3), keepdims=True)
    var = jnp.mean((y - mean) ** 2, axis=(0, 2, 3), keepdims=True)
    yhat = (y - mean) * lax.rsqrt(var + eps)
    yhat = yhat * gamma[None, :, None, None] + beta[None, :, None, None]
    return jnp.maximum(yhat, 0.0)


if __name__ == "__main__":
    in_ch, out_ch = 4, 8
    N, H, W = 2, 16, 16

    key = jax.random.PRNGKey(0)
    kx, kw, kb = jax.random.split(key, 3)

    x = jax.random.normal(kx, (N, in_ch, H, W), dtype=jnp.float32)
    # nn.ConvTranspose2d weight shape: (in_ch, out_ch, kH, kW)
    weight = 0.1 * jax.random.normal(kw, (in_ch, out_ch, 3, 3), dtype=jnp.float32)
    bias = 0.1 * jax.random.normal(kb, (out_ch,), dtype=jnp.float32)
    # BatchNorm2d defaults: gamma=1, beta=0
    gamma = jnp.ones((out_ch,), jnp.float32)
    beta = jnp.zeros((out_ch,), jnp.float32)
    # TODO(synk): BatchNorm running_mean/running_var buffer updates (training-
    # time bookkeeping) are not modeled; they do not affect the forward output.

    out = conv_trans2d_forward(x, weight, bias, gamma, beta)
    out = jax.block_until_ready(out)

    ref = _reference(x, weight, bias, gamma, beta)
    assert out.shape == (N, out_ch, 2 * H, 2 * W), out.shape
    err = float(jnp.max(jnp.abs(out - ref)))
    assert err < 1e-4, err

    print("KERNEL_OK")
</pallas_src>

<mosaic_0001>
module attributes {stable_mosaic.version = 11 : i64} {
  func.func @_fused_convtrans_bn_relu_kernel(%arg0: i32, %arg1: memref<16x512xf32, #tpu.memory_space<vmem>>, %arg2: memref<32x16xf32, #tpu.memory_space<vmem>>, %arg3: memref<16x1xf32, #tpu.memory_space<vmem>>, %arg4: memref<32x512xf32, #tpu.memory_space<vmem>>) attributes {dimension_semantics = [#tpu.dimension_semantics<arbitrary>], iteration_bounds = array<i64: 1>, scalar_prefetch = 0 : i64, scratch_operands = 0 : i64, tpu.core_type = #tpu.core_type<tc>, window_params = [{pipeline_mode = #tpu.pipeline_mode<synchronous>, transform_indices = @transform_0, window_bounds = array<i64: 16, 512>}, {pipeline_mode = #tpu.pipeline_mode<synchronous>, transform_indices = @transform_1, window_bounds = array<i64: 32, 16>}, {pipeline_mode = #tpu.pipeline_mode<synchronous>, transform_indices = @transform_2, window_bounds = array<i64: 16, 1>}, {pipeline_mode = #tpu.pipeline_mode<synchronous>, transform_indices = @transform_3, window_bounds = array<i64: 32, 512>}]} {
    %c0 = arith.constant 0 : index
    %c0_0 = arith.constant 0 : index
    %0 = vector.load %arg1[%c0, %c0_0] : memref<16x512xf32, #tpu.memory_space<vmem>>, vector<16x512xf32>
    %c0_1 = arith.constant 0 : index
    %c0_2 = arith.constant 0 : index
    %1 = vector.load %arg2[%c0_1, %c0_2] : memref<32x16xf32, #tpu.memory_space<vmem>>, vector<32x16xf32>
    %cst = arith.constant dense<0.000000e+00> : vector<32x512xf32>
    %2 = tpu.matmul %1, %0, %cst {dimension_numbers = #tpu.dot_dimension_numbers<[1], [0], [0], [1], [0, 0, 1, 1], [], []>, precision = #tpu.contract_precision<fp32>} : vector<32x16xf32>, vector<16x512xf32>, vector<32x512xf32> -> vector<32x512xf32>
    %3 = vector.extract_strided_slice %2 {offsets = [0, 0], sizes = [8, 512], strides = [1, 1]} : vector<32x512xf32> to vector<8x512xf32>
    %4 = vector.extract_strided_slice %2 {offsets = [8, 0], sizes = [8, 512], strides = [1, 1]} : vector<32x512xf32> to vector<8x512xf32>
    %5 = vector.extract_strided_slice %2 {offsets = [16, 0], sizes = [8, 512], strides = [1, 1]} : vector<32x512xf32> to vector<8x512xf32>
    %6 = vector.extract_strided_slice %2 {offsets = [24, 0], sizes = [8, 512], strides = [1, 1]} : vector<32x512xf32> to vector<8x512xf32>
    %7 = arith.addf %3, %4 : vector<8x512xf32>
    %8 = arith.addf %7, %5 : vector<8x512xf32>
    %9 = arith.addf %8, %6 : vector<8x512xf32>
    %10 = arith.mulf %3, %3 : vector<8x512xf32>
    %11 = arith.mulf %4, %4 : vector<8x512xf32>
    %12 = arith.addf %10, %11 : vector<8x512xf32>
    %13 = arith.mulf %5, %5 : vector<8x512xf32>
    %14 = arith.addf %12, %13 : vector<8x512xf32>
    %15 = arith.mulf %6, %6 : vector<8x512xf32>
    %16 = arith.addf %14, %15 : vector<8x512xf32>
    %cst_3 = arith.constant dense<0.000000e+00> : vector<8xf32>
    %17 = vector.multi_reduction <add>, %9, %cst_3 [1] : vector<8x512xf32> to vector<8xf32>
    %18 = vector.shape_cast %17 : vector<8xf32> to vector<8x1xf32>
    %cst_4 = arith.constant 4.8828125E-4 : f32
    %19 = vector.broadcast %cst_4 : f32 to vector<8x1xf32>
    %20 = arith.mulf %18, %19 : vector<8x1xf32>
    %cst_5 = arith.constant dense<0.000000e+00> : vector<8xf32>
    %21 = vector.multi_reduction <add>, %16, %cst_5 [1] : vector<8x512xf32> to vector<8xf32>
    %22 = vector.shape_cast %21 : vector<8xf32> to vector<8x1xf32>
    %cst_6 = arith.constant 4.8828125E-4 : f32
    %23 = vector.broadcast %cst_6 : f32 to vector<8x1xf32>
    %24 = arith.mulf %22, %23 : vector<8x1xf32>
    %25 = arith.mulf %20, %20 : vector<8x1xf32>
    %26 = arith.subf %24, %25 : vector<8x1xf32>
    %cst_7 = arith.constant 9.99999974E-6 : f32
    %27 = vector.broadcast %cst_7 : f32 to vector<8x1xf32>
    %28 = arith.addf %26, %27 : vector<8x1xf32>
    %29 = math.rsqrt %28 : vector<8x1xf32>
    %c0_8 = arith.constant 0 : index
    %c0_9 = arith.constant 0 : index
    %30 = vector.load %arg3[%c0_8, %c0_9] : memref<16x1xf32, #tpu.memory_space<vmem>>, vector<8x1xf32>
    %31 = arith.mulf %30, %29 : vector<8x1xf32>
    %c8 = arith.constant 8 : index
    %c0_10 = arith.constant 0 : index
    %32 = vector.load %arg3[%c8, %c0_10] : memref<16x1xf32, #tpu.memory_space<vmem>>, vector<8x1xf32>
    %33 = arith.mulf %20, %31 : vector<8x1xf32>
    %34 = arith.subf %32, %33 : vector<8x1xf32>
    %35 = vector.broadcast %31 : vector<8x1xf32> to vector<8x512xf32>
    %36 = arith.mulf %3, %35 : vector<8x512xf32>
    %37 = vector.broadcast %34 : vector<8x1xf32> to vector<8x512xf32>
    %38 = arith.addf %36, %37 : vector<8x512xf32>
    %cst_11 = arith.constant 0.000000e+00 : f32
    %39 = vector.broadcast %cst_11 : f32 to vector<8x512xf32>
    %40 = arith.maximumf %38, %39 : vector<8x512xf32>
    %c0_12 = arith.constant 0 : index
    %c0_13 = arith.constant 0 : index
    %41 = vector.load %arg4[%c0_12, %c0_13] : memref<32x512xf32, #tpu.memory_space<vmem>>, vector<8x512xf32>
    tpu.vector_store %arg4[%c0_12, %c0_13], %40 {strides = array<i32>} : memref<32x512xf32, #tpu.memory_space<vmem>>, vector<8x512xf32>,
    %42 = vector.broadcast %31 : vector<8x1xf32> to vector<8x512xf32>
    %43 = arith.mulf %4, %42 : vector<8x512xf32>
    %44 = vector.broadcast %34 : vector<8x1xf32> to vector<8x512xf32>
    %45 = arith.addf %43, %44 : vector<8x512xf32>
    %cst_14 = arith.constant 0.000000e+00 : f32
    %46 = vector.broadcast %cst_14 : f32 to vector<8x512xf32>
    %47 = arith.maximumf %45, %46 : vector<8x512xf32>
    %c8_15 = arith.constant 8 : index
    %c0_16 = arith.constant 0 : index
    %48 = vector.load %arg4[%c8_15, %c0_16] : memref<32x512xf32, #tpu.memory_space<vmem>>, vector<8x512xf32>
    tpu.vector_store %arg4[%c8_15, %c0_16], %47 {strides = array<i32>} : memref<32x512xf32, #tpu.memory_space<vmem>>, vector<8x512xf32>,
    %49 = vector.broadcast %31 : vector<8x1xf32> to vector<8x512xf32>
    %50 = arith.mulf %5, %49 : vector<8x512xf32>
    %51 = vector.broadcast %34 : vector<8x1xf32> to vector<8x512xf32>
    %52 = arith.addf %50, %51 : vector<8x512xf32>
    %cst_17 = arith.constant 0.000000e+00 : f32
    %53 = vector.broadcast %cst_17 : f32 to vector<8x512xf32>
    %54 = arith.maximumf %52, %53 : vector<8x512xf32>
    %c16 = arith.constant 16 : index
    %c0_18 = arith.constant 0 : index
    %55 = vector.load %arg4[%c16, %c0_18] : memref<32x512xf32, #tpu.memory_space<vmem>>, vector<8x512xf32>
    tpu.vector_store %arg4[%c16, %c0_18], %54 {strides = array<i32>} : memref<32x512xf32, #tpu.memory_space<vmem>>, vector<8x512xf32>,
    %56 = vector.broadcast %31 : vector<8x1xf32> to vector<8x512xf32>
    %57 = arith.mulf %6, %56 : vector<8x512xf32>
    %58 = vector.broadcast %34 : vector<8x1xf32> to vector<8x512xf32>
    %59 = arith.addf %57, %58 : vector<8x512xf32>
    %cst_19 = arith.constant 0.000000e+00 : f32
    %60 = vector.broadcast %cst_19 : f32 to vector<8x512xf32>
    %61 = arith.maximumf %59, %60 : vector<8x512xf32>
    %c24 = arith.constant 24 : index
    %c0_20 = arith.constant 0 : index
    %62 = vector.load %arg4[%c24, %c0_20] : memref<32x512xf32, #tpu.memory_space<vmem>>, vector<8x512xf32>
    tpu.vector_store %arg4[%c24, %c0_20], %61 {strides = array<i32>} : memref<32x512xf32, #tpu.memory_space<vmem>>, vector<8x512xf32>,
    return
  }
  func.func @transform_0(%arg0: i32) -> (i32, i32) {
    %c0_i32 = arith.constant 0 : i32
    %c0_i32_0 = arith.constant 0 : i32
    %c0_i32_1 = arith.constant 0 : i32
    return %c0_i32, %c0_i32_0 : i32, i32
  }
  func.func @transform_1(%arg0: i32) -> (i32, i32) {
    %c0_i32 = arith.constant 0 : i32
    %c0_i32_0 = arith.constant 0 : i32
    %c0_i32_1 = arith.constant 0 : i32
    return %c0_i32, %c0_i32_0 : i32, i32
  }
  func.func @transform_2(%arg0: i32) -> (i32, i32) {
    %c0_i32 = arith.constant 0 : i32
    %c0_i32_0 = arith.constant 0 : i32
    %c0_i32_1 = arith.constant 0 : i32
    return %c0_i32, %c0_i32_0 : i32, i32
  }
  func.func @transform_3(%arg0: i32) -> (i32, i32) {
    %c0_i32 = arith.constant 0 : i32
    %c0_i32_0 = arith.constant 0 : i32
    %c0_i32_1 = arith.constant 0 : i32
    return %c0_i32, %c0_i32_0 : i32, i32
  }
}

</mosaic_0001>

<llo_original>
// kernel: tpu_custom_call.1
$region0: #{tpu_custom_call.1}
  #allocation0 [shape = 'u32[]', space=smem, size = 0x4, offset = 0x4, fixed_abs, tag = 'smem constant byte address 0x4 - core index']
  #allocation1 [shape = 'u32[144,128]{1,0:T(1,128)}', space=vmem, size = 0x12000, scoped, tag = 'internal scratch']
  %s0 = inlined_call_operand.vmem [shape: f32[16,512], index: 0, kind: input, shape index: {}]
  %s1 = inlined_call_operand.vmem [shape: f32[32,16], index: 1, kind: input, shape index: {}]
  %s2 = inlined_call_operand.vmem [shape: f32[16,1], index: 2, kind: input, shape index: {}]
  %s3 = inlined_call_operand.hbm [shape: f32[32,512], index: 3, kind: output, shape index: {}]
  %s4 = sld [smem:[#allocation0]]
  $region22: #{tpu_custom_call.1} parent=0
    _
  %s6 = ssub.s32 1, %s4
  %s7 = scalar_select 0, %s6, %s4
  $region1: #{tpu_custom_call.1} parent=0
    #allocation2 [shape = 'u8[65536]{0}', space=vmem, size = 0x10000, scoped, tag = 'output window, operand 0, single buffered']
    #allocation3 [shape = 's32[1]{0}', space=sflag, size = 0x4, scoped, tag = 'scoped memory for tpu_custom_call.1']
    %8 = vsyncpa [#allocation3], 0
    // Predicated region
    $region2: #{tpu_custom_call.1} parent=1 // pred_check
      _
    $region3: #{tpu_custom_call.1} parent=1 // pred_check_branch
      %10 = sbr.rel (0) target = $region5
    $region4: #{tpu_custom_call.1} parent=1 // pred_region
      _
    $region5: #{tpu_custom_call.1} parent=1 // pred_fallthru
      _
    // Predicated region
    $region6: #{tpu_custom_call.1} parent=1 // pred_check
      _
    $region7: #{tpu_custom_call.1} parent=1 // pred_check_branch
      %12 = sbr.rel (0) target = $region9
    $region8: #{tpu_custom_call.1} parent=1 // pred_region
      _
    $region9: #{tpu_custom_call.1} parent=1 // pred_fallthru
      _
    // Predicated region
    $region10: #{tpu_custom_call.1} parent=1 // pred_check
      _
    $region11: #{tpu_custom_call.1} parent=1 // pred_check_branch
      %14 = sbr.rel (0) target = $region13
    $region12: #{tpu_custom_call.1} parent=1 // pred_region
      _
    $region13: #{tpu_custom_call.1} parent=1 // pred_fallthru
      _
    %v15 = vld [vmem:[%s0] sm:$0xff]
    %v16 = vld [vmem:[%s0 + $0x8] sm:$0xff]
    %v17 = vld [vmem:[%s0 + $0x10] sm:$0xff]
    %v18 = vld [vmem:[%s0 + $0x18] sm:$0xff]
    %v19 = vld [vmem:[%s0 + $0x20] sm:$0xff]
    %v20 = vld [vmem:[%s0 + $0x28] sm:$0xff]
    %v21 = vld [vmem:[%s0 + $0x30] sm:$0xff]
    %v22 = vld [vmem:[%s0 + $0x38] sm:$0xff]
    %v23 = vld [vmem:[%s1] sm:$0xff]
    %v24 = vld [vmem:[%s1 + $0x8] sm:$0xff]
    %v25 = vld [vmem:[%s1 + $0x10] sm:$0xff]
    %v26 = vld [vmem:[%s1 + $0x18] sm:$0xff]
    %vm27 = vcmask 130048
    %v29 = vsel %vm27, %v23, 0
    %v32 = vsel %vm27, %v24, 0
    %v35 = vsel %vm27, %v25, 0
    %v38 = vsel %vm27, %v26, 0
    %40 = vmatprep.subr.mxu0 0.0
    %41 = vmatpush1.msra.mxu0 0.0
    %42 = vmatprep.subr.mxu0 0.0
    %43 = vmatpush1.msra.mxu0 0.0
    %44 = vmatprep.subr.mxu0 0.0
    %45 = vmatpush1.msra.mxu0 0.0
    %46 = vmatprep.subr.mxu0 0.0
    %47 = vmatpush1.msra.mxu0 0.0
    %48 = vmatprep.subr.mxu0 0.0
    %49 = vmatpush1.msra.mxu0 0.0
    %50 = vmatprep.subr.mxu0 0.0
    %51 = vmatpush1.msra.mxu0 0.0
    %52 = vmatprep.subr.mxu0 0.0
    %53 = vmatpush1.msra.mxu0 0.0
    %54 = vmatprep.subr.mxu0 0.0
    %55 = vmatpush1.msra.mxu0 0.0
    %56 = vmatprep.subr.mxu0 0.0
    %57 = vmatpush1.msra.mxu0 0.0
    %58 = vmatprep.subr.mxu0 0.0
    %59 = vmatpush1.msra.mxu0 0.0
    %60 = vmatprep.subr.mxu0 0.0
    %61 = vmatpush1.msra.mxu0 0.0
    %62 = vmatprep.subr.mxu0 0.0
    %63 = vmatpush1.msra.mxu0 0.0
    %64 = vmatprep.subr.mxu0 0.0
    %65 = vmatpush1.msra.mxu0 0.0
    %66 = vmatprep.subr.mxu0 0.0
    %67 = vmatpush1.msra.mxu0 0.0
    %v68 = vand.u32 %v20, 4294901760
    %69 = vmatprep.subr.mxu0 %v68
    %v70 = vand.u32 %v19, 4294901760
    %71 = vmatpush1.msra.mxu0 %v70
    %v72 = vand.u32 %v16, 4294901760
    %73 = vmatprep.subr.mxu0 %v72
    %v74 = vand.u32 %v15, 4294901760
    %75 = vmatpush1.msra.mxu0 %v74
    %76 = vmatprep.subr.mxu0 0.0
    %77 = vmatpush2.msra.mxu0 0.0
    %78 = vmatprep.subr.mxu0 0.0
    %79 = vmatpush2.msra.mxu0 0.0
    %80 = vmatprep.subr.mxu0 0.0
    %81 = vmatpush2.msra.mxu0 0.0
    %82 = vmatprep.subr.mxu0 0.0
    %83 = vmatpush2.msra.mxu0 0.0
    %84 = vmatprep.subr.mxu0 0.0
    %85 = vmatpush2.msra.mxu0 0.0
    %86 = vmatprep.subr.mxu0 0.0
    %87 = vmatpush2.msra.mxu0 0.0
    %88 = vmatprep.subr.mxu0 0.0
    %89 = vmatpush2.msra.mxu0 0.0
    %90 = vmatprep.subr.mxu0 0.0
    %91 = vmatpush2.msra.mxu0 0.0
    %92 = vmatprep.subr.mxu0 0.0
    %93 = vmatpush2.msra.mxu0 0.0
    %94 = vmatprep.subr.mxu0 0.0
    %95 = vmatpush2.msra.mxu0 0.0
    %96 = vmatprep.subr.mxu0 0.0
    %97 = vmatpush2.msra.mxu0 0.0
    %98 = vmatprep.subr.mxu0 0.0
    %99 = vmatpush2.msra.mxu0 0.0
    %100 = vmatprep.subr.mxu0 0.0
    %101 = vmatpush2.msra.mxu0 0.0
    %102 = vmatprep.subr.mxu0 0.0
    %103 = vmatpush2.msra.mxu0 0.0
    %104 = vmatprep.subr.mxu0 0.0
    %105 = vmatpush2.msra.mxu0 0.0
    %106 = vmatprep.subr.mxu0 0.0
    %107 = vmatpush2.msra.mxu0 0.0
    %108 = vmatprep.mubr.f32.mxu0 0.0
    %v109 = vand.u32 %v29, 4294901760
    %v110 = vsub.f32 %v29, %v109
    %v111 = vand.u32 %v110, 4294901760
    %v112 = vsub.f32 %v110, %v111
    %v113 = vand.u32 %v112, 4294901760
    %114 = vmatmul.mubr.f32.gmra.mxu0 %v113
    %v115 = vpop.f32.mrf.mxu0
    %v116 = vadd.f32 0.0, %v115
    %v117 = vpop.f32.mrf.mxu0
    %v118 = vadd.f32 0.0, %v117
    %119 = vmatprep.mubr.f32.mxu0 0.0
    %v120 = vand.u32 %v32, 4294901760
    %v121 = vsub.f32 %v32, %v120
    %v122 = vand.u32 %v121, 4294901760
    %v123 = vsub.f32 %v121, %v122
    %v124 = vand.u32 %v123, 4294901760
    %125 = vmatmul.mubr.f32.gmra.mxu0 %v124
    %v126 = vpop.f32.mrf.mxu0
    %v127 = vadd.f32 0.0, %v126
    %v128 = vpop.f32.mrf.mxu0
    %v129 = vadd.f32 0.0, %v128
    %130 = vmatprep.mubr.f32.mxu0 0.0
    %v131 = vand.u32 %v35, 4294901760
    %v132 = vsub.f32 %v35, %v131
    %v133 = vand.u32 %v132, 4294901760
    %v134 = vsub.f32 %v132, %v133
    %v135 = vand.u32 %v134, 4294901760
    %136 = vmatmul.mubr.f32.gmra.mxu0 %v135
    %v137 = vpop.f32.mrf.mxu0
    %v138 = vadd.f32 0.0, %v137
    %v139 = vpop.f32.mrf.mxu0
    %v140 = vadd.f32 0.0, %v139
    %141 = vmatprep.mubr.f32.mxu0 0.0
    %v142 = vand.u32 %v38, 4294901760
    %v143 = vsub.f32 %v38, %v142
    %v144 = vand.u32 %v143, 4294901760
    %v145 = vsub.f32 %v143, %v144
    %v146 = vand.u32 %v145, 4294901760
    %147 = vmatmul.mubr.f32.gmra.mxu0 %v146
    %v148 = vpop.f32.mrf.mxu0
    %v149 = vadd.f32 0.0, %v148
    %v150 = vpop.f32.mrf.mxu0
    %v151 = vadd.f32 0.0, %v150
    %152 = vdwg.mxu0
    %153 = vmatprep.subr.mxu0 0.0
    %154 = vmatpush1.msra.mxu0 0.0
    %155 = vmatprep.subr.mxu0 0.0
    %156 = vmatpush1.msra.mxu0 0.0
    %157 = vmatprep.subr.mxu0 0.0
    %158 = vmatpush1.msra.mxu0 0.0
    %159 = vmatprep.subr.mxu0 0.0
    %160 = vmatpush1.msra.mxu0 0.0
    %161 = vmatprep.subr.mxu0 0.0
    %162 = vmatpush1.msra.mxu0 0.0
    %163 = vmatprep.subr.mxu0 0.0
    %164 = vmatpush1.msra.mxu0 0.0
    %165 = vmatprep.subr.mxu0 0.0
    %166 = vmatpush1.msra.mxu0 0.0
    %167 = vmatprep.subr.mxu0 0.0
    %168 = vmatpush1.msra.mxu0 0.0
    %169 = vmatprep.subr.mxu0 0.0
    %170 = vmatpush1.msra.mxu0 0.0
    %171 = vmatprep.subr.mxu0 0.0
    %172 = vmatpush1.msra.mxu0 0.0
    %173 = vmatprep.subr.mxu0 0.0
    %174 = vmatpush1.msra.mxu0 0.0
    %175 = vmatprep.subr.mxu0 0.0
    %176 = vmatpush1.msra.mxu0 0.0
    %177 = vmatprep.subr.mxu0 0.0
    %178 = vmatpush1.msra.mxu0 0.0
    %179 = vmatprep.subr.mxu0 0.0
    %180 = vmatpush1.msra.mxu0 0.0
    %v181 = vand.u32 %v20, 4294901760
    %v182 = vsub.f32 %v20, %v181
    %v183 = vand.u32 %v182, 4294901760
    %v184 = vsub.f32 %v182, %v183
    %v185 = vand.u32 %v184, 4294901760
    %186 = vmatprep.subr.mxu0 %v185
    %v187 = vand.u32 %v19, 4294901760
    %v188 = vsub.f32 %v19, %v187
    %v189 = vand.u32 %v188, 4294901760
    %v190 = vsub.f32 %v188, %v189
    %v191 = vand.u32 %v190, 4294901760
    %192 = vmatpush1.msra.mxu0 %v191
    %v193 = vand.u32 %v16, 4294901760
    %v194 = vsub.f32 %v16, %v193
    %v195 = vand.u32 %v194, 4294901760
    %v196 = vsub.f32 %v194, %v195
    %v197 = vand.u32 %v196, 4294901760
    %198 = vmatprep.subr.mxu0 %v197
    %v199 = vand.u32 %v15, 4294901760
    %v200 = vsub.f32 %v15, %v199
    %v201 = vand.u32 %v200, 4294901760
    %v202 = vsub.f32 %v200, %v201
    %v203 = vand.u32 %v202, 4294901760
    %204 = vmatpush1.msra.mxu0 %v203
    %205 = vmatprep.subr.mxu0 0.0
    %206 = vmatpush2.msra.mxu0 0.0
    %207 = vmatprep.subr.mxu0 0.0
    %208 = vmatpush2.msra.mxu0 0.0
    %209 = vmatprep.subr.mxu0 0.0
    %210 = vmatpush2.msra.mxu0 0.0
    %211 = vmatprep.subr.mxu0 0.0
    %212 = vmatpush2.msra.mxu0 0.0
    %213 = vmatprep.subr.mxu0 0.0
    %214 = vmatpush2.msra.mxu0 0.0
    %215 = vmatprep.subr.mxu0 0.0
    %216 = vmatpush2.msra.mxu0 0.0
    %217 = vmatprep.subr.mxu0 0.0
    %218 = vmatpush2.msra.mxu0 0.0
    %219 = vmatprep.subr.mxu0 0.0
    %220 = vmatpush2.msra.mxu0 0.0
    %221 = vmatprep.subr.mxu0 0.0
    %222 = vmatpush2.msra.mxu0 0.0
    %223 = vmatprep.subr.mxu0 0.0
    %224 = vmatpush2.msra.mxu0 0.0
    %225 = vmatprep.subr.mxu0 0.0
    %226 = vmatpush2.msra.mxu0 0.0
    %227 = vmatprep.subr.mxu0 0.0
    %228 = vmatpush2.msra.mxu0 0.0
    %229 = vmatprep.subr.mxu0 0.0
    %230 = vmatpush2.msra.mxu0 0.0
    %231 = vmatprep.subr.mxu0 0.0
    %232 = vmatpush2.msra.mxu0 0.0
    %233 = vmatprep.subr.mxu0 0.0
    %234 = vmatpush2.msra.mxu0 0.0
    %235 = vmatprep.subr.mxu0 0.0
    %236 = vmatpush2.msra.mxu0 0.0
    %237 = vmatprep.mubr.f32.mxu0 0.0
    %v238 = vand.u32 %v29, 4294901760
    %239 = vmatmul.mubr.f32.gmra.mxu0 %v238
    %v240 = vpop.f32.mrf.mxu0
    %v241 = vadd.f32 %v116, %v240
    %v242 = vpop.f32.mrf.mxu0
    %v243 = vadd.f32 %v118, %v242
    %244 = vmatprep.mubr.f32.mxu0 0.0
    %v245 = vand.u32 %v32, 4294901760
    %246 = vmatmul.mubr.f32.gmra.mxu0 %v245
    %v247 = vpop.f32.mrf.mxu0
    %v248 = vadd.f32 %v127, %v247
    %v249 = vpop.f32.mrf.mxu0
    %v250 = vadd.f32 %v129, %v249
    %251 = vmatprep.mubr.f32.mxu0 0.0
    %v252 = vand.u32 %v35, 4294901760
    %253 = vmatmul.mubr.f32.gmra.mxu0 %v252
    %v254 = vpop.f32.mrf.mxu0
    %v255 = vadd.f32 %v138, %v254
    %v256 = vpop.f32.mrf.mxu0
    %v257 = vadd.f32 %v140, %v256
    %258 = vmatprep.mubr.f32.mxu0 0.0
    %v259 = vand.u32 %v38, 4294901760
    %260 = vmatmul.mubr.f32.gmra.mxu0 %v259
    %v261 = vpop.f32.mrf.mxu0
    %v262 = vadd.f32 %v149, %v261
    %v263 = vpop.f32.mrf.mxu0
    %v264 = vadd.f32 %v151, %v263
    %265 = vdwg.mxu0
    %266 = vmatprep.subr.mxu0 0.0
    %267 = vmatpush1.msra.mxu0 0.0
    %268 = vmatprep.subr.mxu0 0.0
    %269 = vmatpush1.msra.mxu0 0.0
    %270 = vmatprep.subr.mxu0 0.0
    %271 = vmatpush1.msra.mxu0 0.0
    %272 = vmatprep.subr.mxu0 0.0
    %273 = vmatpush1.msra.mxu0 0.0
    %274 = vmatprep.subr.mxu0 0.0
    %275 = vmatpush1.msra.mxu0 0.0
    %276 = vmatprep.subr.mxu0 0.0
    %277 = vmatpush1.msra.mxu0 0.0
    %278 = vmatprep.subr.mxu0 0.0
    %279 = vmatpush1.msra.mxu0 0.0
    %280 = vmatprep.subr.mxu0 0.0
    %281 = vmatpush1.msra.mxu0 0.0
    %282 = vmatprep.subr.mxu0 0.0
    %283 = vmatpush1.msra.mxu0 0.0
    %284 = vmatprep.subr.mxu0 0.0
    %285 = vmatpush1.msra.mxu0 0.0
    %286 = vmatprep.subr.mxu0 0.0
    %287 = vmatpush1.msra.mxu0 0.0
    %288 = vmatprep.subr.mxu0 0.0
    %289 = vmatpush1.msra.mxu0 0.0
    %290 = vmatprep.subr.mxu0 0.0
    %291 = vmatpush1.msra.mxu0 0.0
    %292 = vmatprep.subr.mxu0 0.0
    %293 = vmatpush1.msra.mxu0 0.0
    %v294 = vand.u32 %v20, 4294901760
    %v295 = vsub.f32 %v20, %v294
    %296 = vmatprep.subr.mxu0 %v295
    %v297 = vand.u32 %v19, 4294901760
    %v298 = vsub.f32 %v19, %v297
    %299 = vmatpush1.msra.mxu0 %v298
    %v300 = vand.u32 %v16, 4294901760
    %v301 = vsub.f32 %v16, %v300
    %302 = vmatprep.subr.mxu0 %v301
    %v303 = vand.u32 %v15, 4294901760
    %v304 = vsub.f32 %v15, %v303
    %305 = vmatpush1.msra.mxu0 %v304
    %306 = vmatprep.subr.mxu0 0.0
    %307 = vmatpush2.msra.mxu0 0.0
    %308 = vmatprep.subr.mxu0 0.0
    %309 = vmatpush2.msra.mxu0 0.0
    %310 = vmatprep.subr.mxu0 0.0
    %311 = vmatpush2.msra.mxu0 0.0
    %312 = vmatprep.subr.mxu0 0.0
    %313 = vmatpush2.msra.mxu0 0.0
    %314 = vmatprep.subr.mxu0 0.0
    %315 = vmatpush2.msra.mxu0 0.0
    %316 = vmatprep.subr.mxu0 0.0
    %317 = vmatpush2.msra.mxu0 0.0
    %318 = vmatprep.subr.mxu0 0.0
    %319 = vmatpush2.msra.mxu0 0.0
    %320 = vmatprep.subr.mxu0 0.0
    %321 = vmatpush2.msra.mxu0 0.0
    %322 = vmatprep.subr.mxu0 0.0
    %323 = vmatpush2.msra.mxu0 0.0
    %324 = vmatprep.subr.mxu0 0.0
    %325 = vmatpush2.msra.mxu0 0.0
    %326 = vmatprep.subr.mxu0 0.0
    %327 = vmatpush2.msra.mxu0 0.0
    %328 = vmatprep.subr.mxu0 0.0
    %329 = vmatpush2.msra.mxu0 0.0
    %330 = vmatprep.subr.mxu0 0.0
    %331 = vmatpush2.msra.mxu0 0.0
    %332 = vmatprep.subr.mxu0 0.0
    %333 = vmatpush2.msra.mxu0 0.0
    %334 = vmatprep.subr.mxu0 0.0
    %335 = vmatpush2.msra.mxu0 0.0
    %336 = vmatprep.subr.mxu0 0.0
    %337 = vmatpush2.msra.mxu0 0.0
    %338 = vmatprep.mubr.f32.mxu0 0.0
    %v339 = vand.u32 %v29, 4294901760
    %v340 = vsub.f32 %v29, %v339
    %341 = vmatmul.mubr.f32.gmra.mxu0 %v340
    %v342 = vpop.f32.mrf.mxu0
    %v343 = vadd.f32 %v241, %v342
    %v344 = vpop.f32.mrf.mxu0
    %v345 = vadd.f32 %v243, %v344
    %346 = vmatprep.mubr.f32.mxu0 0.0
    %v347 = vand.u32 %v32, 4294901760
    %v348 = vsub.f32 %v32, %v347
    %349 = vmatmul.mubr.f32.gmra.mxu0 %v348
    %v350 = vpop.f32.mrf.mxu0
    %v351 = vadd.f32 %v248, %v350
    %v352 = vpop.f32.mrf.mxu0
    %v353 = vadd.f32 %v250, %v352
    %354 = vmatprep.mubr.f32.mxu0 0.0
    %v355 = vand.u32 %v35, 4294901760
    %v356 = vsub.f32 %v35, %v355
    %357 = vmatmul.mubr.f32.gmra.mxu0 %v356
    %v358 = vpop.f32.mrf.mxu0
    %v359 = vadd.f32 %v255, %v358
    %v360 = vpop.f32.mrf.mxu0
    %v361 = vadd.f32 %v257, %v360
    %362 = vmatprep.mubr.f32.mxu0 0.0
    %v363 = vand.u32 %v38, 4294901760
    %v364 = vsub.f32 %v38, %v363
    %365 = vmatmul.mubr.f32.gmra.mxu0 %v364
    %v366 = vpop.f32.mrf.mxu0
    %v367 = vadd.f32 %v262, %v366
    %v368 = vpop.f32.mrf.mxu0
    %v369 = vadd.f32 %v264, %v368
    %370 = vdwg.mxu0
    %371 = vmatprep.subr.mxu0 0.0
    %372 = vmatpush1.msra.mxu0 0.0
    %373 = vmatprep.subr.mxu0 0.0
    %374 = vmatpush1.msra.mxu0 0.0
    %375 = vmatprep.subr.mxu0 0.0
    %376 = vmatpush1.msra.mxu0 0.0
    %377 = vmatprep.subr.mxu0 0.0
    %378 = vmatpush1.msra.mxu0 0.0
    %379 = vmatprep.subr.mxu0 0.0
    %380 = vmatpush1.msra.mxu0 0.0
    %381 = vmatprep.subr.mxu0 0.0
    %382 = vmatpush1.msra.mxu0 0.0
    %383 = vmatprep.subr.mxu0 0.0
    %384 = vmatpush1.msra.mxu0 0.0
    %385 = vmatprep.subr.mxu0 0.0
    %386 = vmatpush1.msra.mxu0 0.0
    %387 = vmatprep.subr.mxu0 0.0
    %388 = vmatpush1.msra.mxu0 0.0
    %389 = vmatprep.subr.mxu0 0.0
    %390 = vmatpush1.msra.mxu0 0.0
    %391 = vmatprep.subr.mxu0 0.0
    %392 = vmatpush1.msra.mxu0 0.0
    %393 = vmatprep.subr.mxu0 0.0
    %394 = vmatpush1.msra.mxu0 0.0
    %395 = vmatprep.subr.mxu0 0.0
    %396 = vmatpush1.msra.mxu0 0.0
    %397 = vmatprep.subr.mxu0 0.0
    %398 = vmatpush1.msra.mxu0 0.0
    %v399 = vand.u32 %v20, 4294901760
    %400 = vmatprep.subr.mxu0 %v399
    %v401 = vand.u32 %v19, 4294901760
    %402 = vmatpush1.msra.mxu0 %v401
    %v403 = vand.u32 %v16, 4294901760
    %404 = vmatprep.subr.mxu0 %v403
    %v405 = vand.u32 %v15, 4294901760
    %406 = vmatpush1.msra.mxu0 %v405
    %407 = vmatprep.subr.mxu0 0.0
    %408 = vmatpush2.msra.mxu0 0.0
    %409 = vmatprep.subr.mxu0 0.0
    %410 = vmatpush2.msra.mxu0 0.0
    %411 = vmatprep.subr.mxu0 0.0
    %412 = vmatpush2.msra.mxu0 0.0
    %413 = vmatprep.subr.mxu0 0.0
    %414 = vmatpush2.msra.mxu0 0.0
    %415 = vmatprep.subr.mxu0 0.0
    %416 = vmatpush2.msra.mxu0 0.0
    %417 = vmatprep.subr.mxu0 0.0
    %418 = vmatpush2.msra.mxu0 0.0
    %419 = vmatprep.subr.mxu0 0.0
    %420 = vmatpush2.msra.mxu0 0.0
    %421 = vmatprep.subr.mxu0 0.0
    %422 = vmatpush2.msra.mxu0 0.0
    %423 = vmatprep.subr.mxu0 0.0
    %424 = vmatpush2.msra.mxu0 0.0
    %425 = vmatprep.subr.mxu0 0.0
    %426 = vmatpush2.msra.mxu0 0.0
    %427 = vmatprep.subr.mxu0 0.0
    %428 = vmatpush2.msra.mxu0 0.0
    %429 = vmatprep.subr.mxu0 0.0
    %430 = vmatpush2.msra.mxu0 0.0
    %431 = vmatprep.subr.mxu0 0.0
    %432 = vmatpush2.msra.mxu0 0.0
    %433 = vmatprep.subr.mxu0 0.0
    %434 = vmatpush2.msra.mxu0 0.0
    %435 = vmatprep.subr.mxu0 0.0
    %436 = vmatpush2.msra.mxu0 0.0
    %437 = vmatprep.subr.mxu0 0.0
    %438 = vmatpush2.msra.mxu0 0.0
    %439 = vmatprep.mubr.f32.mxu0 0.0
    %v440 = vand.u32 %v29, 4294901760
    %v441 = vsub.f32 %v29, %v440
    %v442 = vand.u32 %v441, 4294901760
    %443 = vmatmul.mubr.f32.gmra.mxu0 %v442
    %v444 = vpop.f32.mrf.mxu0
    %v445 = vadd.f32 %v343, %v444
    %v446 = vpop.f32.mrf.mxu0
    %v447 = vadd.f32 %v345, %v446
    %448 = vmatprep.mubr.f32.mxu0 0.0
    %v449 = vand.u32 %v32, 4294901760
    %v450 = vsub.f32 %v32, %v449
    %v451 = vand.u32 %v450, 4294901760
    %452 = vmatmul.mubr.f32.gmra.mxu0 %v451
    %v453 = vpop.f32.mrf.mxu0
    %v454 = vadd.f32 %v351, %v453
    %v455 = vpop.f32.mrf.mxu0
    %v456 = vadd.f32 %v353, %v455
    %457 = vmatprep.mubr.f32.mxu0 0.0
    %v458 = vand.u32 %v35, 4294901760
    %v459 = vsub.f32 %v35, %v458
    %v460 = vand.u32 %v459, 4294901760
    %461 = vmatmul.mubr.f32.gmra.mxu0 %v460
    %v462 = vpop.f32.mrf.mxu0
    %v463 = vadd.f32 %v359, %v462
    %v464 = vpop.f32.mrf.mxu0
    %v465 = vadd.f32 %v361, %v464
    %466 = vmatprep.mubr.f32.mxu0 0.0
    %v467 = vand.u32 %v38, 4294901760
    %v468 = vsub.f32 %v38, %v467
    %v469 = vand.u32 %v468, 4294901760
    %470 = vmatmul.mubr.f32.gmra.mxu0 %v469
    %v471 = vpop.f32.mrf.mxu0
    %v472 = vadd.f32 %v367, %v471
    %v473 = vpop.f32.mrf.mxu0
    %v474 = vadd.f32 %v369, %v473
    %475 = vdwg.mxu0
    %476 = vmatprep.subr.mxu0 0.0
    %477 = vmatpush1.msra.mxu0 0.0
    %478 = vmatprep.subr.mxu0 0.0
    %479 = vmatpush1.msra.mxu0 0.0
    %480 = vmatprep.subr.mxu0 0.0
    %481 = vmatpush1.msra.mxu0 0.0
    %482 = vmatprep.subr.mxu0 0.0
    %483 = vmatpush1.msra.mxu0 0.0
    %484 = vmatprep.subr.mxu0 0.0
    %485 = vmatpush1.msra.mxu0 0.0
    %486 = vmatprep.subr.mxu0 0.0
    %487 = vmatpush1.msra.mxu0 0.0
    %488 = vmatprep.subr.mxu0 0.0
    %489 = vmatpush1.msra.mxu0 0.0
    %490 = vmatprep.subr.mxu0 0.0
    %491 = vmatpush1.msra.mxu0 0.0
    %492 = vmatprep.subr.mxu0 0.0
    %493 = vmatpush1.msra.mxu0 0.0
    %494 = vmatprep.subr.mxu0 0.0
    %495 = vmatpush1.msra.mxu0 0.0
    %496 = vmatprep.subr.mxu0 0.0
    %497 = vmatpush1.msra.mxu0 0.0
    %498 = vmatprep.subr.mxu0 0.0
    %499 = vmatpush1.msra.mxu0 0.0
    %500 = vmatprep.subr.mxu0 0.0
    %501 = vmatpush1.msra.mxu0 0.0
    %502 = vmatprep.subr.mxu0 0.0
    %503 = vmatpush1.msra.mxu0 0.0
    %v504 = vand.u32 %v20, 4294901760
    %v505 = vsub.f32 %v20, %v504
    %v506 = vand.u32 %v505, 4294901760
    %507 = vmatprep.subr.mxu0 %v506
    %v508 = vand.u32 %v19, 4294901760
    %v509 = vsub.f32 %v19, %v508
    %v510 = vand.u32 %v509, 4294901760
    %511 = vmatpush1.msra.mxu0 %v510
    %v512 = vand.u32 %v16, 4294901760
    %v513 = vsub.f32 %v16, %v512
    %v514 = vand.u32 %v513, 4294901760
    %515 = vmatprep.subr.mxu0 %v514
    %v516 = vand.u32 %v15, 4294901760
    %v517 = vsub.f32 %v15, %v516
    %v518 = vand.u32 %v517, 4294901760
    %519 = vmatpush1.msra.mxu0 %v518
    %520 = vmatprep.subr.mxu0 0.0
    %521 = vmatpush2.msra.mxu0 0.0
    %522 = vmatprep.subr.mxu0 0.0
    %523 = vmatpush2.msra.mxu0 0.0
    %524 = vmatprep.subr.mxu0 0.0
    %525 = vmatpush2.msra.mxu0 0.0
    %526 = vmatprep.subr.mxu0 0.0
    %527 = vmatpush2.msra.mxu0 0.0
    %528 = vmatprep.subr.mxu0 0.0
    %529 = vmatpush2.msra.mxu0 0.0
    %530 = vmatprep.subr.mxu0 0.0
    %531 = vmatpush2.msra.mxu0 0.0
    %532 = vmatprep.subr.mxu0 0.0
    %533 = vmatpush2.msra.mxu0 0.0
    %534 = vmatprep.subr.mxu0 0.0
    %535 = vmatpush2.msra.mxu0 0.0
    %536 = vmatprep.subr.mxu0 0.0
    %537 = vmatpush2.msra.mxu0 0.0
    %538 = vmatprep.subr.mxu0 0.0
    %539 = vmatpush2.msra.mxu0 0.0
    %540 = vmatprep.subr.mxu0 0.0
    %541 = vmatpush2.msra.mxu0 0.0
    %542 = vmatprep.subr.mxu0 0.0
    %543 = vmatpush2.msra.mxu0 0.0
    %544 = vmatprep.subr.mxu0 0.0
    %545 = vmatpush2.msra.mxu0 0.0
    %546 = vmatprep.subr.mxu0 0.0
    %547 = vmatpush2.msra.mxu0 0.0
    %548 = vmatprep.subr.mxu0 0.0
    %549 = vmatpush2.msra.mxu0 0.0
    %550 = vmatprep.subr.mxu0 0.0
    %551 = vmatpush2.msra.mxu0 0.0
    %552 = vmatprep.mubr.f32.mxu0 0.0
    %v553 = vand.u32 %v29, 4294901760
    %554 = vmatmul.mubr.f32.gmra.mxu0 %v553
    %v555 = vpop.f32.mrf.mxu0
    %v556 = vadd.f32 %v445, %v555
    %v557 = vpop.f32.mrf.mxu0
    %v558 = vadd.f32 %v447, %v557
    %559 = vmatprep.mubr.f32.mxu0 0.0
    %v560 = vand.u32 %v32, 4294901760
    %561 = vmatmul.mubr.f32.gmra.mxu0 %v560
    %v562 = vpop.f32.mrf.mxu0
    %v563 = vadd.f32 %v454, %v562
    %v564 = vpop.f32.mrf.mxu0
    %v565 = vadd.f32 %v456, %v564
    %566 = vmatprep.mubr.f32.mxu0 0.0
    %v567 = vand.u32 %v35, 4294901760
    %568 = vmatmul.mubr.f32.gmra.mxu0 %v567
    %v569 = vpop.f32.mrf.mxu0
    %v570 = vadd.f32 %v463, %v569
    %v571 = vpop.f32.mrf.mxu0
    %v572 = vadd.f32 %v465, %v571
    %573 = vmatprep.mubr.f32.mxu0 0.0
    %v574 = vand.u32 %v38, 4294901760
    %575 = vmatmul.mubr.f32.gmra.mxu0 %v574
    %v576 = vpop.f32.mrf.mxu0
    %v577 = vadd.f32 %v472, %v576
    %v578 = vpop.f32.mrf.mxu0
    %v579 = vadd.f32 %v474, %v578
    %580 = vdwg.mxu0
    %581 = vmatprep.subr.mxu0 0.0
    %582 = vmatpush1.msra.mxu0 0.0
    %583 = vmatprep.subr.mxu0 0.0
    %584 = vmatpush1.msra.mxu0 0.0
    %585 = vmatprep.subr.mxu0 0.0
    %586 = vmatpush1.msra.mxu0 0.0
    %587 = vmatprep.subr.mxu0 0.0
    %588 = vmatpush1.msra.mxu0 0.0
    %589 = vmatprep.subr.mxu0 0.0
    %590 = vmatpush1.msra.mxu0 0.0
    %591 = vmatprep.subr.mxu0 0.0
    %592 = vmatpush1.msra.mxu0 0.0
    %593 = vmatprep.subr.mxu0 0.0
    %594 = vmatpush1.msra.mxu0 0.0
    %595 = vmatprep.subr.mxu0 0.0
    %596 = vmatpush1.msra.mxu0 0.0
    %597 = vmatprep.subr.mxu0 0.0
    %598 = vmatpush1.msra.mxu0 0.0
    %599 = vmatprep.subr.mxu0 0.0
    %600 = vmatpush1.msra.mxu0 0.0
    %601 = vmatprep.subr.mxu0 0.0
    %602 = vmatpush1.msra.mxu0 0.0
    %603 = vmatprep.subr.mxu0 0.0
    %604 = vmatpush1.msra.mxu0 0.0
    %605 = vmatprep.subr.mxu0 0.0
    %606 = vmatpush1.msra.mxu0 0.0
    %607 = vmatprep.subr.mxu0 0.0
    %608 = vmatpush1.msra.mxu0 0.0
    %v609 = vand.u32 %v20, 4294901760
    %610 = vmatprep.subr.mxu0 %v609
    %v611 = vand.u32 %v19, 4294901760
    %612 = vmatpush1.msra.mxu0 %v611
    %v613 = vand.u32 %v16, 4294901760
    %614 = vmatprep.subr.mxu0 %v613
    %v615 = vand.u32 %v15, 4294901760
    %616 = vmatpush1.msra.mxu0 %v615
    %617 = vmatprep.subr.mxu0 0.0
    %618 = vmatpush2.msra.mxu0 0.0
    %619 = vmatprep.subr.mxu0 0.0
    %620 = vmatpush2.msra.mxu0 0.0
    %621 = vmatprep.subr.mxu0 0.0
    %622 = vmatpush2.msra.mxu0 0.0
    %623 = vmatprep.subr.mxu0 0.0
    %624 = vmatpush2.msra.mxu0 0.0
    %625 = vmatprep.subr.mxu0 0.0
    %626 = vmatpush2.msra.mxu0 0.0
    %627 = vmatprep.subr.mxu0 0.0
    %628 = vmatpush2.msra.mxu0 0.0
    %629 = vmatprep.subr.mxu0 0.0
    %630 = vmatpush2.msra.mxu0 0.0
    %631 = vmatprep.subr.mxu0 0.0
    %632 = vmatpush2.msra.mxu0 0.0
    %633 = vmatprep.subr.mxu0 0.0
    %634 = vmatpush2.msra.mxu0 0.0
    %635 = vmatprep.subr.mxu0 0.0
    %636 = vmatpush2.msra.mxu0 0.0
    %637 = vmatprep.subr.mxu0 0.0
    %638 = vmatpush2.msra.mxu0 0.0
    %639 = vmatprep.subr.mxu0 0.0
    %640 = vmatpush2.msra.mxu0 0.0
    %641 = vmatprep.subr.mxu0 0.0
    %642 = vmatpush2.msra.mxu0 0.0
    %643 = vmatprep.subr.mxu0 0.0
    %644 = vmatpush2.msra.mxu0 0.0
    %645 = vmatprep.subr.mxu0 0.0
    %646 = vmatpush2.msra.mxu0 0.0
    %647 = vmatprep.subr.mxu0 0.0
    %648 = vmatpush2.msra.mxu0 0.0
    %649 = vmatprep.mubr.f32.mxu0 0.0
    %v650 = vand.u32 %v29, 4294901760
    %651 = vmatmul.mubr.f32.gmra.mxu0 %v650
    %v652 = vpop.f32.mrf.mxu0
    %v653 = vadd.f32 %v556, %v652
    %v654 = vpop.f32.mrf.mxu0
    %v655 = vadd.f32 %v558, %v654
    %656 = vmatprep.mubr.f32.mxu0 0.0
    %v657 = vand.u32 %v32, 4294901760
    %658 = vmatmul.mubr.f32.gmra.mxu0 %v657
    %v659 = vpop.f32.mrf.mxu0
    %v660 = vadd.f32 %v563, %v659
    %v661 = vpop.f32.mrf.mxu0
    %v662 = vadd.f32 %v565, %v661
    %663 = vmatprep.mubr.f32.mxu0 0.0
    %v664 = vand.u32 %v35, 4294901760
    %665 = vmatmul.mubr.f32.gmra.mxu0 %v664
    %v666 = vpop.f32.mrf.mxu0
    %v667 = vadd.f32 %v570, %v666
    %v668 = vpop.f32.mrf.mxu0
    %v669 = vadd.f32 %v572, %v668
    %670 = vmatprep.mubr.f32.mxu0 0.0
    %v671 = vand.u32 %v38, 4294901760
    %672 = vmatmul.mubr.f32.gmra.mxu0 %v671
    %v673 = vpop.f32.mrf.mxu0
    %v674 = vadd.f32 %v577, %v673
    %v675 = vpop.f32.mrf.mxu0
    %v676 = vadd.f32 %v579, %v675
    %677 = vdwg.mxu0
    %678 = vmatprep.subr.mxu0 0.0
    %679 = vmatpush1.msra.mxu0 0.0
    %680 = vmatprep.subr.mxu0 0.0
    %681 = vmatpush1.msra.mxu0 0.0
    %682 = vmatprep.subr.mxu0 0.0
    %683 = vmatpush1.msra.mxu0 0.0
    %684 = vmatprep.subr.mxu0 0.0
    %685 = vmatpush1.msra.mxu0 0.0
    %686 = vmatprep.subr.mxu0 0.0
    %687 = vmatpush1.msra.mxu0 0.0
    %688 = vmatprep.subr.mxu0 0.0
    %689 = vmatpush1.msra.mxu0 0.0
    %690 = vmatprep.subr.mxu0 0.0
    %691 = vmatpush1.msra.mxu0 0.0
    %692 = vmatprep.subr.mxu0 0.0
    %693 = vmatpush1.msra.mxu0 0.0
    %694 = vmatprep.subr.mxu0 0.0
    %695 = vmatpush1.msra.mxu0 0.0
    %696 = vmatprep.subr.mxu0 0.0
    %697 = vmatpush1.msra.mxu0 0.0
    %698 = vmatprep.subr.mxu0 0.0
    %699 = vmatpush1.msra.mxu0 0.0
    %700 = vmatprep.subr.mxu0 0.0
    %701 = vmatpush1.msra.mxu0 0.0
    %702 = vmatprep.subr.mxu0 0.0
    %703 = vmatpush1.msra.mxu0 0.0
    %704 = vmatprep.subr.mxu0 0.0
    %705 = vmatpush1.msra.mxu0 0.0
    %v706 = vand.u32 %v22, 4294901760
    %707 = vmatprep.subr.mxu0 %v706
    %v708 = vand.u32 %v21, 4294901760
    %709 = vmatpush1.msra.mxu0 %v708
    %v710 = vand.u32 %v18, 4294901760
    %711 = vmatprep.subr.mxu0 %v710
    %v712 = vand.u32 %v17, 4294901760
    %713 = vmatpush1.msra.mxu0 %v712
    %714 = vmatprep.subr.mxu0 0.0
    %715 = vmatpush2.msra.mxu0 0.0
    %716 = vmatprep.subr.mxu0 0.0
    %717 = vmatpush2.msra.mxu0 0.0
    %718 = vmatprep.subr.mxu0 0.0
    %719 = vmatpush2.msra.mxu0 0.0
    %720 = vmatprep.subr.mxu0 0.0
    %721 = vmatpush2.msra.mxu0 0.0
    %722 = vmatprep.subr.mxu0 0.0
    %723 = vmatpush2.msra.mxu0 0.0
    %724 = vmatprep.subr.mxu0 0.0
    %725 = vmatpush2.msra.mxu0 0.0
    %726 = vmatprep.subr.mxu0 0.0
    %727 = vmatpush2.msra.mxu0 0.0
    %728 = vmatprep.subr.mxu0 0.0
    %729 = vmatpush2.msra.mxu0 0.0
    %730 = vmatprep.subr.mxu0 0.0
    %731 = vmatpush2.msra.mxu0 0.0
    %732 = vmatprep.subr.mxu0 0.0
    %733 = vmatpush2.msra.mxu0 0.0
    %734 = vmatprep.subr.mxu0 0.0
    %735 = vmatpush2.msra.mxu0 0.0
    %736 = vmatprep.subr.mxu0 0.0
    %737 = vmatpush2.msra.mxu0 0.0
    %738 = vmatprep.subr.mxu0 0.0
    %739 = vmatpush2.msra.mxu0 0.0
    %740 = vmatprep.subr.mxu0 0.0
    %741 = vmatpush2.msra.mxu0 0.0
    %742 = vmatprep.subr.mxu0 0.0
    %743 = vmatpush2.msra.mxu0 0.0
    %744 = vmatprep.subr.mxu0 0.0
    %745 = vmatpush2.msra.mxu0 0.0
    %746 = vmatprep.mubr.f32.mxu0 0.0
    %v747 = vand.u32 %v29, 4294901760
    %v748 = vsub.f32 %v29, %v747
    %v749 = vand.u32 %v748, 4294901760
    %v750 = vsub.f32 %v748, %v749
    %v751 = vand.u32 %v750, 4294901760
    %752 = vmatmul.mubr.f32.gmra.mxu0 %v751
    %v753 = vpop.f32.mrf.mxu0
    %v754 = vadd.f32 0.0, %v753
    %v755 = vpop.f32.mrf.mxu0
    %v756 = vadd.f32 0.0, %v755
    %757 = vmatprep.mubr.f32.mxu0 0.0
    %v758 = vand.u32 %v32, 4294901760
    %v759 = vsub.f32 %v32, %v758
    %v760 = vand.u32 %v759, 4294901760
    %v761 = vsub.f32 %v759, %v760
    %v762 = vand.u32 %v761, 4294901760
    %763 = vmatmul.mubr.f32.gmra.mxu0 %v762
    %v764 = vpop.f32.mrf.mxu0
    %v765 = vadd.f32 0.0, %v764
    %v766 = vpop.f32.mrf.mxu0
    %v767 = vadd.f32 0.0, %v766
    %768 = vmatprep.mubr.f32.mxu0 0.0
    %v769 = vand.u32 %v35, 4294901760
    %v770 = vsub.f32 %v35, %v769
    %v771 = vand.u32 %v770, 4294901760
    %v772 = vsub.f32 %v770, %v771
    %v773 = vand.u32 %v772, 4294901760
    %774 = vmatmul.mubr.f32.gmra.mxu0 %v773
    %v775 = vpop.f32.mrf.mxu0
    %v776 = vadd.f32 0.0, %v775
    %v777 = vpop.f32.mrf.mxu0
    %v778 = vadd.f32 0.0, %v777
    %779 = vmatprep.mubr.f32.mxu0 0.0
    %v780 = vand.u32 %v38, 4294901760
    %v781 = vsub.f32 %v38, %v780
    %v782 = vand.u32 %v781, 4294901760
    %v783 = vsub.f32 %v781, %v782
    %v784 = vand.u32 %v783, 4294901760
    %785 = vmatmul.mubr.f32.gmra.mxu0 %v784
    %v786 = vpop.f32.mrf.mxu0
    %v787 = vadd.f32 0.0, %v786
    %v788 = vpop.f32.mrf.mxu0
    %v789 = vadd.f32 0.0, %v788
    %790 = vdwg.mxu0
    %791 = vmatprep.subr.mxu0 0.0
    %792 = vmatpush1.msra.mxu0 0.0
    %793 = vmatprep.subr.mxu0 0.0
    %794 = vmatpush1.msra.mxu0 0.0
    %795 = vmatprep.subr.mxu0 0.0
    %796 = vmatpush1.msra.mxu0 0.0
    %797 = vmatprep.subr.mxu0 0.0
    %798 = vmatpush1.msra.mxu0 0.0
    %799 = vmatprep.subr.mxu0 0.0
    %800 = vmatpush1.msra.mxu0 0.0
    %801 = vmatprep.subr.mxu0 0.0
    %802 = vmatpush1.msra.mxu0 0.0
    %803 = vmatprep.subr.mxu0 0.0
    %804 = vmatpush1.msra.mxu0 0.0
    %805 = vmatprep.subr.mxu0 0.0
    %806 = vmatpush1.msra.mxu0 0.0
    %807 = vmatprep.subr.mxu0 0.0
    %808 = vmatpush1.msra.mxu0 0.0
    %809 = vmatprep.subr.mxu0 0.0
    %810 = vmatpush1.msra.mxu0 0.0
    %811 = vmatprep.subr.mxu0 0.0
    %812 = vmatpush1.msra.mxu0 0.0
    %813 = vmatprep.subr.mxu0 0.0
    %814 = vmatpush1.msra.mxu0 0.0
    %815 = vmatprep.subr.mxu0 0.0
    %816 = vmatpush1.msra.mxu0 0.0
    %817 = vmatprep.subr.mxu0 0.0
    %818 = vmatpush1.msra.mxu0 0.0
    %v819 = vand.u32 %v22, 4294901760
    %v820 = vsub.f32 %v22, %v819
    %v821 = vand.u32 %v820, 4294901760
    %v822 = vsub.f32 %v820, %v821
    %v823 = vand.u32 %v822, 4294901760
    %824 = vmatprep.subr.mxu0 %v823
    %v825 = vand.u32 %v21, 4294901760
    %v826 = vsub.f32 %v21, %v825
    %v827 = vand.u32 %v826, 4294901760
    %v828 = vsub.f32 %v826, %v827
    %v829 = vand.u32 %v828, 4294901760
    %830 = vmatpush1.msra.mxu0 %v829
    %v831 = vand.u32 %v18, 4294901760
    %v832 = vsub.f32 %v18, %v831
    %v833 = vand.u32 %v832, 4294901760
    %v834 = vsub.f32 %v832, %v833
    %v835 = vand.u32 %v834, 4294901760
    %836 = vmatprep.subr.mxu0 %v835
    %v837 = vand.u32 %v17, 4294901760
    %v838 = vsub.f32 %v17, %v837
    %v839 = vand.u32 %v838, 4294901760
    %v840 = vsub.f32 %v838, %v839
    %v841 = vand.u32 %v840, 4294901760
    %842 = vmatpush1.msra.mxu0 %v841
    %843 = vmatprep.subr.mxu0 0.0
    %844 = vmatpush2.msra.mxu0 0.0
    %845 = vmatprep.subr.mxu0 0.0
    %846 = vmatpush2.msra.mxu0 0.0
    %847 = vmatprep.subr.mxu0 0.0
    %848 = vmatpush2.msra.mxu0 0.0
    %849 = vmatprep.subr.mxu0 0.0
    %850 = vmatpush2.msra.mxu0 0.0
    %851 = vmatprep.subr.mxu0 0.0
    %852 = vmatpush2.msra.mxu0 0.0
    %853 = vmatprep.subr.mxu0 0.0
    %854 = vmatpush2.msra.mxu0 0.0
    %855 = vmatprep.subr.mxu0 0.0
    %856 = vmatpush2.msra.mxu0 0.0
    %857 = vmatprep.subr.mxu0 0.0
    %858 = vmatpush2.msra.mxu0 0.0
    %859 = vmatprep.subr.mxu0 0.0
    %860 = vmatpush2.msra.mxu0 0.0
    %861 = vmatprep.subr.mxu0 0.0
    %862 = vmatpush2.msra.mxu0 0.0
    %863 = vmatprep.subr.mxu0 0.0
    %864 = vmatpush2.msra.mxu0 0.0
    %865 = vmatprep.subr.mxu0 0.0
    %866 = vmatpush2.msra.mxu0 0.0
    %867 = vmatprep.subr.mxu0 0.0
    %868 = vmatpush2.msra.mxu0 0.0
    %869 = vmatprep.subr.mxu0 0.0
    %870 = vmatpush2.msra.mxu0 0.0
    %871 = vmatprep.subr.mxu0 0.0
    %872 = vmatpush2.msra.mxu0 0.0
    %873 = vmatprep.subr.mxu0 0.0
    %874 = vmatpush2.msra.mxu0 0.0
    %875 = vmatprep.mubr.f32.mxu0 0.0
    %v876 = vand.u32 %v29, 4294901760
    %877 = vmatmul.mubr.f32.gmra.mxu0 %v876
    %v878 = vpop.f32.mrf.mxu0
    %v879 = vadd.f32 %v754, %v878
    %v880 = vpop.f32.mrf.mxu0
    %v881 = vadd.f32 %v756, %v880
    %882 = vmatprep.mubr.f32.mxu0 0.0
    %v883 = vand.u32 %v32, 4294901760
    %884 = vmatmul.mubr.f32.gmra.mxu0 %v883
    %v885 = vpop.f32.mrf.mxu0
    %v886 = vadd.f32 %v765, %v885
    %v887 = vpop.f32.mrf.mxu0
    %v888 = vadd.f32 %v767, %v887
    %889 = vmatprep.mubr.f32.mxu0 0.0
    %v890 = vand.u32 %v35, 4294901760
    %891 = vmatmul.mubr.f32.gmra.mxu0 %v890
    %v892 = vpop.f32.mrf.mxu0
    %v893 = vadd.f32 %v776, %v892
    %v894 = vpop.f32.mrf.mxu0
    %v895 = vadd.f32 %v778, %v894
    %896 = vmatprep.mubr.f32.mxu0 0.0
    %v897 = vand.u32 %v38, 4294901760
    %898 = vmatmul.mubr.f32.gmra.mxu0 %v897
    %v899 = vpop.f32.mrf.mxu0
    %v900 = vadd.f32 %v787, %v899
    %v901 = vpop.f32.mrf.mxu0
    %v902 = vadd.f32 %v789, %v901
    %903 = vdwg.mxu0
    %904 = vmatprep.subr.mxu0 0.0
    %905 = vmatpush1.msra.mxu0 0.0
    %906 = vmatprep.subr.mxu0 0.0
    %907 = vmatpush1.msra.mxu0 0.0
    %908 = vmatprep.subr.mxu0 0.0
    %909 = vmatpush1.msra.mxu0 0.0
    %910 = vmatprep.subr.mxu0 0.0
    %911 = vmatpush1.msra.mxu0 0.0
    %912 = vmatprep.subr.mxu0 0.0
    %913 = vmatpush1.msra.mxu0 0.0
    %914 = vmatprep.subr.mxu0 0.0
    %915 = vmatpush1.msra.mxu0 0.0
    %916 = vmatprep.subr.mxu0 0.0
    %917 = vmatpush1.msra.mxu0 0.0
    %918 = vmatprep.subr.mxu0 0.0
    %919 = vmatpush1.msra.mxu0 0.0
    %920 = vmatprep.subr.mxu0 0.0
    %921 = vmatpush1.msra.mxu0 0.0
    %922 = vmatprep.subr.mxu0 0.0
    %923 = vmatpush1.msra.mxu0 0.0
    %924 = vmatprep.subr.mxu0 0.0
    %925 = vmatpush1.msra.mxu0 0.0
    %926 = vmatprep.subr.mxu0 0.0
    %927 = vmatpush1.msra.mxu0 0.0
    %928 = vmatprep.subr.mxu0 0.0
    %929 = vmatpush1.msra.mxu0 0.0
    %930 = vmatprep.subr.mxu0 0.0
    %931 = vmatpush1.msra.mxu0 0.0
    %v932 = vand.u32 %v22, 4294901760
    %v933 = vsub.f32 %v22, %v932
    %934 = vmatprep.subr.mxu0 %v933
    %v935 = vand.u32 %v21, 4294901760
    %v936 = vsub.f32 %v21, %v935
    %937 = vmatpush1.msra.mxu0 %v936
    %v938 = vand.u32 %v18, 4294901760
    %v939 = vsub.f32 %v18, %v938
    %940 = vmatprep.subr.mxu0 %v939
    %v941 = vand.u32 %v17, 4294901760
    %v942 = vsub.f32 %v17, %v941
    %943 = vmatpush1.msra.mxu0 %v942
    %944 = vmatprep.subr.mxu0 0.0
    %945 = vmatpush2.msra.mxu0 0.0
    %946 = vmatprep.subr.mxu0 0.0
    %947 = vmatpush2.msra.mxu0 0.0
    %948 = vmatprep.subr.mxu0 0.0
    %949 = vmatpush2.msra.mxu0 0.0
    %950 = vmatprep.subr.mxu0 0.0
    %951 = vmatpush2.msra.mxu0 0.0
    %952 = vmatprep.subr.mxu0 0.0
    %953 = vmatpush2.msra.mxu0 0.0
    %954 = vmatprep.subr.mxu0 0.0
    %955 = vmatpush2.msra.mxu0 0.0
    %956 = vmatprep.subr.mxu0 0.0
    %957 = vmatpush2.msra.mxu0 0.0
    %958 = vmatprep.subr.mxu0 0.0
    %959 = vmatpush2.msra.mxu0 0.0
    %960 = vmatprep.subr.mxu0 0.0
    %961 = vmatpush2.msra.mxu0 0.0
    %962 = vmatprep.subr.mxu0 0.0
    %963 = vmatpush2.msra.mxu0 0.0
    %964 = vmatprep.subr.mxu0 0.0
    %965 = vmatpush2.msra.mxu0 0.0
    %966 = vmatprep.subr.mxu0 0.0
    %967 = vmatpush2.msra.mxu0 0.0
    %968 = vmatprep.subr.mxu0 0.0
    %969 = vmatpush2.msra.mxu0 0.0
    %970 = vmatprep.subr.mxu0 0.0
    %971 = vmatpush2.msra.mxu0 0.0
    %972 = vmatprep.subr.mxu0 0.0
    %973 = vmatpush2.msra.mxu0 0.0
    %974 = vmatprep.subr.mxu0 0.0
    %975 = vmatpush2.msra.mxu0 0.0
    %976 = vmatprep.mubr.f32.mxu0 0.0
    %v977 = vand.u32 %v29, 4294901760
    %v978 = vsub.f32 %v29, %v977
    %979 = vmatmul.mubr.f32.gmra.mxu0 %v978
    %v980 = vpop.f32.mrf.mxu0
    %v981 = vadd.f32 %v879, %v980
    %v982 = vpop.f32.mrf.mxu0
    %v983 = vadd.f32 %v881, %v982
    %984 = vmatprep.mubr.f32.mxu0 0.0
    %v985 = vand.u32 %v32, 4294901760
    %v986 = vsub.f32 %v32, %v985
    %987 = vmatmul.mubr.f32.gmra.mxu0 %v986
    %v988 = vpop.f32.mrf.mxu0
    %v989 = vadd.f32 %v886, %v988
    %v990 = vpop.f32.mrf.mxu0
    %v991 = vadd.f32 %v888, %v990
    %992 = vmatprep.mubr.f32.mxu0 0.0
    %v993 = vand.u32 %v35, 4294901760
    %v994 = vsub.f32 %v35, %v993
    %995 = vmatmul.mubr.f32.gmra.mxu0 %v994
    %v996 = vpop.f32.mrf.mxu0
    %v997 = vadd.f32 %v893, %v996
    %v998 = vpop.f32.mrf.mxu0
    %v999 = vadd.f32 %v895, %v998
    %1000 = vmatprep.mubr.f32.mxu0 0.0
    %v1001 = vand.u32 %v38, 4294901760
    %v1002 = vsub.f32 %v38, %v1001
    %1003 = vmatmul.mubr.f32.gmra.mxu0 %v1002
    %v1004 = vpop.f32.mrf.mxu0
    %v1005 = vadd.f32 %v900, %v1004
    %v1006 = vpop.f32.mrf.mxu0
    %v1007 = vadd.f32 %v902, %v1006
    %1008 = vdwg.mxu0
    %1009 = vmatprep.subr.mxu0 0.0
    %1010 = vmatpush1.msra.mxu0 0.0
    %1011 = vmatprep.subr.mxu0 0.0
    %1012 = vmatpush1.msra.mxu0 0.0
    %1013 = vmatprep.subr.mxu0 0.0
    %1014 = vmatpush1.msra.mxu0 0.0
    %1015 = vmatprep.subr.mxu0 0.0
    %1016 = vmatpush1.msra.mxu0 0.0
    %1017 = vmatprep.subr.mxu0 0.0
    %1018 = vmatpush1.msra.mxu0 0.0
    %1019 = vmatprep.subr.mxu0 0.0
    %1020 = vmatpush1.msra.mxu0 0.0
    %1021 = vmatprep.subr.mxu0 0.0
    %1022 = vmatpush1.msra.mxu0 0.0
    %1023 = vmatprep.subr.mxu0 0.0
    %1024 = vmatpush1.msra.mxu0 0.0
    %1025 = vmatprep.subr.mxu0 0.0
    %1026 = vmatpush1.msra.mxu0 0.0
    %1027 = vmatprep.subr.mxu0 0.0
    %1028 = vmatpush1.msra.mxu0 0.0
    %1029 = vmatprep.subr.mxu0 0.0
    %1030 = vmatpush1.msra.mxu0 0.0
    %1031 = vmatprep.subr.mxu0 0.0
    %1032 = vmatpush1.msra.mxu0 0.0
    %1033 = vmatprep.subr.mxu0 0.0
    %1034 = vmatpush1.msra.mxu0 0.0
    %1035 = vmatprep.subr.mxu0 0.0
    %1036 = vmatpush1.msra.mxu0 0.0
    %v1037 = vand.u32 %v22, 4294901760
    %1038 = vmatprep.subr.mxu0 %v1037
    %v1039 = vand.u32 %v21, 4294901760
    %1040 = vmatpush1.msra.mxu0 %v1039
    %v1041 = vand.u32 %v18, 4294901760
    %1042 = vmatprep.subr.mxu0 %v1041
    %v1043 = vand.u32 %v17, 4294901760
    %1044 = vmatpush1.msra.mxu0 %v1043
    %1045 = vmatprep.subr.mxu0 0.0
    %1046 = vmatpush2.msra.mxu0 0.0
    %1047 = vmatprep.subr.mxu0 0.0
    %1048 = vmatpush2.msra.mxu0 0.0
    %1049 = vmatprep.subr.mxu0 0.0
    %1050 = vmatpush2.msra.mxu0 0.0
    %1051 = vmatprep.subr.mxu0 0.0
    %1052 = vmatpush2.msra.mxu0 0.0
    %1053 = vmatprep.subr.mxu0 0.0
    %1054 = vmatpush2.msra.mxu0 0.0
    %1055 = vmatprep.subr.mxu0 0.0
    %1056 = vmatpush2.msra.mxu0 0.0
    %1057 = vmatprep.subr.mxu0 0.0
    %1058 = vmatpush2.msra.mxu0 0.0
    %1059 = vmatprep.subr.mxu0 0.0
    %1060 = vmatpush2.msra.mxu0 0.0
    %1061 = vmatprep.subr.mxu0 0.0
    %1062 = vmatpush2.msra.mxu0 0.0
    %1063 = vmatprep.subr.mxu0 0.0
    %1064 = vmatpush2.msra.mxu0 0.0
    %1065 = vmatprep.subr.mxu0 0.0
    %1066 = vmatpush2.msra.mxu0 0.0
    %1067 = vmatprep.subr.mxu0 0.0
    %1068 = vmatpush2.msra.mxu0 0.0
    %1069 = vmatprep.subr.mxu0 0.0
    %1070 = vmatpush2.msra.mxu0 0.0
    %1071 = vmatprep.subr.mxu0 0.0
    %1072 = vmatpush2.msra.mxu0 0.0
    %1073 = vmatprep.subr.mxu0 0.0
    %1074 = vmatpush2.msra.mxu0 0.0
    %1075 = vmatprep.subr.mxu0 0.0
    %1076 = vmatpush2.msra.mxu0 0.0
    %1077 = vmatprep.mubr.f32.mxu0 0.0
    %v1078 = vand.u32 %v29, 4294901760
    %v1079 = vsub.f32 %v29, %v1078
    %v1080 = vand.u32 %v1079, 4294901760
    %1081 = vmatmul.mubr.f32.gmra.mxu0 %v1080
    %v1082 = vpop.f32.mrf.mxu0
    %v1083 = vadd.f32 %v981, %v1082
    %v1084 = vpop.f32.mrf.mxu0
    %v1085 = vadd.f32 %v983, %v1084
    %1086 = vmatprep.mubr.f32.mxu0 0.0
    %v1087 = vand.u32 %v32, 4294901760
    %v1088 = vsub.f32 %v32, %v1087
    %v1089 = vand.u32 %v1088, 4294901760
    %1090 = vmatmul.mubr.f32.gmra.mxu0 %v1089
    %v1091 = vpop.f32.mrf.mxu0
    %v1092 = vadd.f32 %v989, %v1091
    %v1093 = vpop.f32.mrf.mxu0
    %v1094 = vadd.f32 %v991, %v1093
    %1095 = vmatprep.mubr.f32.mxu0 0.0
    %v1096 = vand.u32 %v35, 4294901760
    %v1097 = vsub.f32 %v35, %v1096
    %v1098 = vand.u32 %v1097, 4294901760
    %1099 = vmatmul.mubr.f32.gmra.mxu0 %v1098
    %v1100 = vpop.f32.mrf.mxu0
    %v1101 = vadd.f32 %v997, %v1100
    %v1102 = vpop.f32.mrf.mxu0
    %v1103 = vadd.f32 %v999, %v1102
    %1104 = vmatprep.mubr.f32.mxu0 0.0
    %v1105 = vand.u32 %v38, 4294901760
    %v1106 = vsub.f32 %v38, %v1105
    %v1107 = vand.u32 %v1106, 4294901760
    %1108 = vmatmul.mubr.f32.gmra.mxu0 %v1107
    %v1109 = vpop.f32.mrf.mxu0
    %v1110 = vadd.f32 %v1005, %v1109
    %v1111 = vpop.f32.mrf.mxu0
    %v1112 = vadd.f32 %v1007, %v1111
    %1113 = vdwg.mxu0
    %1114 = vmatprep.subr.mxu0 0.0
    %1115 = vmatpush1.msra.mxu0 0.0
    %1116 = vmatprep.subr.mxu0 0.0
    %1117 = vmatpush1.msra.mxu0 0.0
    %1118 = vmatprep.subr.mxu0 0.0
    %1119 = vmatpush1.msra.mxu0 0.0
    %1120 = vmatprep.subr.mxu0 0.0
    %1121 = vmatpush1.msra.mxu0 0.0
    %1122 = vmatprep.subr.mxu0 0.0
    %1123 = vmatpush1.msra.mxu0 0.0
    %1124 = vmatprep.subr.mxu0 0.0
    %1125 = vmatpush1.msra.mxu0 0.0
    %1126 = vmatprep.subr.mxu0 0.0
    %1127 = vmatpush1.msra.mxu0 0.0
    %1128 = vmatprep.subr.mxu0 0.0
    %1129 = vmatpush1.msra.mxu0 0.0
    %1130 = vmatprep.subr.mxu0 0.0
    %1131 = vmatpush1.msra.mxu0 0.0
    %1132 = vmatprep.subr.mxu0 0.0
    %1133 = vmatpush1.msra.mxu0 0.0
    %1134 = vmatprep.subr.mxu0 0.0
    %1135 = vmatpush1.msra.mxu0 0.0
    %1136 = vmatprep.subr.mxu0 0.0
    %1137 = vmatpush1.msra.mxu0 0.0
    %1138 = vmatprep.subr.mxu0 0.0
    %1139 = vmatpush1.msra.mxu0 0.0
    %1140 = vmatprep.subr.mxu0 0.0
    %1141 = vmatpush1.msra.mxu0 0.0
    %v1142 = vand.u32 %v22, 4294901760
    %v1143 = vsub.f32 %v22, %v1142
    %v1144 = vand.u32 %v1143, 4294901760
    %1145 = vmatprep.subr.mxu0 %v1144
    %v1146 = vand.u32 %v21, 4294901760
    %v1147 = vsub.f32 %v21, %v1146
    %v1148 = vand.u32 %v1147, 4294901760
    %1149 = vmatpush1.msra.mxu0 %v1148
    %v1150 = vand.u32 %v18, 4294901760
    %v1151 = vsub.f32 %v18, %v1150
    %v1152 = vand.u32 %v1151, 4294901760
    %1153 = vmatprep.subr.mxu0 %v1152
    %v1154 = vand.u32 %v17, 4294901760
    %v1155 = vsub.f32 %v17, %v1154
    %v1156 = vand.u32 %v1155, 4294901760
    %1157 = vmatpush1.msra.mxu0 %v1156
    %1158 = vmatprep.subr.mxu0 0.0
    %1159 = vmatpush2.msra.mxu0 0.0
    %1160 = vmatprep.subr.mxu0 0.0
    %1161 = vmatpush2.msra.mxu0 0.0
    %1162 = vmatprep.subr.mxu0 0.0
    %1163 = vmatpush2.msra.mxu0 0.0
    %1164 = vmatprep.subr.mxu0 0.0
    %1165 = vmatpush2.msra.mxu0 0.0
    %1166 = vmatprep.subr.mxu0 0.0
    %1167 = vmatpush2.msra.mxu0 0.0
    %1168 = vmatprep.subr.mxu0 0.0
    %1169 = vmatpush2.msra.mxu0 0.0
    %1170 = vmatprep.subr.mxu0 0.0
    %1171 = vmatpush2.msra.mxu0 0.0
    %1172 = vmatprep.subr.mxu0 0.0
    %1173 = vmatpush2.msra.mxu0 0.0
    %1174 = vmatprep.subr.mxu0 0.0
    %1175 = vmatpush2.msra.mxu0 0.0
    %1176 = vmatprep.subr.mxu0 0.0
    %1177 = vmatpush2.msra.mxu0 0.0
    %1178 = vmatprep.subr.mxu0 0.0
    %1179 = vmatpush2.msra.mxu0 0.0
    %1180 = vmatprep.subr.mxu0 0.0
    %1181 = vmatpush2.msra.mxu0 0.0
    %1182 = vmatprep.subr.mxu0 0.0
    %1183 = vmatpush2.msra.mxu0 0.0
    %1184 = vmatprep.subr.mxu0 0.0
    %1185 = vmatpush2.msra.mxu0 0.0
    %1186 = vmatprep.subr.mxu0 0.0
    %1187 = vmatpush2.msra.mxu0 0.0
    %1188 = vmatprep.subr.mxu0 0.0
    %1189 = vmatpush2.msra.mxu0 0.0
    %1190 = vmatprep.mubr.f32.mxu0 0.0
    %v1191 = vand.u32 %v29, 4294901760
    %1192 = vmatmul.mubr.f32.gmra.mxu0 %v1191
    %v1193 = vpop.f32.mrf.mxu0
    %v1194 = vadd.f32 %v1083, %v1193
    %v1195 = vpop.f32.mrf.mxu0
    %v1196 = vadd.f32 %v1085, %v1195
    %1197 = vmatprep.mubr.f32.mxu0 0.0
    %v1198 = vand.u32 %v32, 4294901760
    %1199 = vmatmul.mubr.f32.gmra.mxu0 %v1198
    %v1200 = vpop.f32.mrf.mxu0
    %v1201 = vadd.f32 %v1092, %v1200
    %v1202 = vpop.f32.mrf.mxu0
    %v1203 = vadd.f32 %v1094, %v1202
    %1204 = vmatprep.mubr.f32.mxu0 0.0
    %v1205 = vand.u32 %v35, 4294901760
    %1206 = vmatmul.mubr.f32.gmra.mxu0 %v1205
    %v1207 = vpop.f32.mrf.mxu0
    %v1208 = vadd.f32 %v1101, %v1207
    %v1209 = vpop.f32.mrf.mxu0
    %v1210 = vadd.f32 %v1103, %v1209
    %1211 = vmatprep.mubr.f32.mxu0 0.0
    %v1212 = vand.u32 %v38, 4294901760
    %1213 = vmatmul.mubr.f32.gmra.mxu0 %v1212
    %v1214 = vpop.f32.mrf.mxu0
    %v1215 = vadd.f32 %v1110, %v1214
    %v1216 = vpop.f32.mrf.mxu0
    %v1217 = vadd.f32 %v1112, %v1216
    %1218 = vdwg.mxu0
    %1219 = vmatprep.subr.mxu0 0.0
    %1220 = vmatpush1.msra.mxu0 0.0
    %1221 = vmatprep.subr.mxu0 0.0
    %1222 = vmatpush1.msra.mxu0 0.0
    %1223 = vmatprep.subr.mxu0 0.0
    %1224 = vmatpush1.msra.mxu0 0.0
    %1225 = vmatprep.subr.mxu0 0.0
    %1226 = vmatpush1.msra.mxu0 0.0
    %1227 = vmatprep.subr.mxu0 0.0
    %1228 = vmatpush1.msra.mxu0 0.0
    %1229 = vmatprep.subr.mxu0 0.0
    %1230 = vmatpush1.msra.mxu0 0.0
    %1231 = vmatprep.subr.mxu0 0.0
    %1232 = vmatpush1.msra.mxu0 0.0
    %1233 = vmatprep.subr.mxu0 0.0
    %1234 = vmatpush1.msra.mxu0 0.0
    %1235 = vmatprep.subr.mxu0 0.0
    %1236 = vmatpush1.msra.mxu0 0.0
    %1237 = vmatprep.subr.mxu0 0.0
    %1238 = vmatpush1.msra.mxu0 0.0
    %1239 = vmatprep.subr.mxu0 0.0
    %1240 = vmatpush1.msra.mxu0 0.0
    %1241 = vmatprep.subr.mxu0 0.0
    %1242 = vmatpush1.msra.mxu0 0.0
    %1243 = vmatprep.subr.mxu0 0.0
    %1244 = vmatpush1.msra.mxu0 0.0
    %1245 = vmatprep.subr.mxu0 0.0
    %1246 = vmatpush1.msra.mxu0 0.0
    %v1247 = vand.u32 %v22, 4294901760
    %1248 = vmatprep.subr.mxu0 %v1247
    %v1249 = vand.u32 %v21, 4294901760
    %1250 = vmatpush1.msra.mxu0 %v1249
    %v1251 = vand.u32 %v18, 4294901760
    %1252 = vmatprep.subr.mxu0 %v1251
    %v1253 = vand.u32 %v17, 4294901760
    %1254 = vmatpush1.msra.mxu0 %v1253
    %1255 = vmatprep.subr.mxu0 0.0
    %1256 = vmatpush2.msra.mxu0 0.0
    %1257 = vmatprep.subr.mxu0 0.0
    %1258 = vmatpush2.msra.mxu0 0.0
    %1259 = vmatprep.subr.mxu0 0.0
    %1260 = vmatpush2.msra.mxu0 0.0
    %1261 = vmatprep.subr.mxu0 0.0
    %1262 = vmatpush2.msra.mxu0 0.0
    %1263 = vmatprep.subr.mxu0 0.0
    %1264 = vmatpush2.msra.mxu0 0.0
    %1265 = vmatprep.subr.mxu0 0.0
    %1266 = vmatpush2.msra.mxu0 0.0
    %1267 = vmatprep.subr.mxu0 0.0
    %1268 = vmatpush2.msra.mxu0 0.0
    %1269 = vmatprep.subr.mxu0 0.0
    %1270 = vmatpush2.msra.mxu0 0.0
    %1271 = vmatprep.subr.mxu0 0.0
    %1272 = vmatpush2.msra.mxu0 0.0
    %1273 = vmatprep.subr.mxu0 0.0
    %1274 = vmatpush2.msra.mxu0 0.0
    %1275 = vmatprep.subr.mxu0 0.0
    %1276 = vmatpush2.msra.mxu0 0.0
    %1277 = vmatprep.subr.mxu0 0.0
    %1278 = vmatpush2.msra.mxu0 0.0
    %1279 = vmatprep.subr.mxu0 0.0
    %1280 = vmatpush2.msra.mxu0 0.0
    %1281 = vmatprep.subr.mxu0 0.0
    %1282 = vmatpush2.msra.mxu0 0.0
    %1283 = vmatprep.subr.mxu0 0.0
    %1284 = vmatpush2.msra.mxu0 0.0
    %1285 = vmatprep.subr.mxu0 0.0
    %1286 = vmatpush2.msra.mxu0 0.0
    %1287 = vmatprep.mubr.f32.mxu0 0.0
    %v1288 = vand.u32 %v29, 4294901760
    %1289 = vmatmul.mubr.f32.gmra.mxu0 %v1288
    %v1290 = vpop.f32.mrf.mxu0
    %v1291 = vadd.f32 %v1194, %v1290
    %v1292 = vpop.f32.mrf.mxu0
    %v1293 = vadd.f32 %v1196, %v1292
    %1294 = vmatprep.mubr.f32.mxu0 0.0
    %v1295 = vand.u32 %v32, 4294901760
    %1296 = vmatmul.mubr.f32.gmra.mxu0 %v1295
    %v1297 = vpop.f32.mrf.mxu0
    %v1298 = vadd.f32 %v1201, %v1297
    %v1299 = vpop.f32.mrf.mxu0
    %v1300 = vadd.f32 %v1203, %v1299
    %1301 = vmatprep.mubr.f32.mxu0 0.0
    %v1302 = vand.u32 %v35, 4294901760
    %1303 = vmatmul.mubr.f32.gmra.mxu0 %v1302
    %v1304 = vpop.f32.mrf.mxu0
    %v1305 = vadd.f32 %v1208, %v1304
    %v1306 = vpop.f32.mrf.mxu0
    %v1307 = vadd.f32 %v1210, %v1306
    %1308 = vmatprep.mubr.f32.mxu0 0.0
    %v1309 = vand.u32 %v38, 4294901760
    %1310 = vmatmul.mubr.f32.gmra.mxu0 %v1309
    %v1311 = vpop.f32.mrf.mxu0
    %v1312 = vadd.f32 %v1215, %v1311
    %v1313 = vpop.f32.mrf.mxu0
    %v1314 = vadd.f32 %v1217, %v1313
    %1315 = vdwg.mxu0
    %v1316 = vadd.f32 %v653, %v660
    %v1317 = vadd.f32 %v655, %v662
    %v1318 = vadd.f32 %v1291, %v1298
    %v1319 = vadd.f32 %v1293, %v1300
    %v1320 = vadd.f32 %v1316, %v667
    %v1321 = vadd.f32 %v1317, %v669
    %v1322 = vadd.f32 %v1318, %v1305
    %v1323 = vadd.f32 %v1319, %v1307
    %v1324 = vadd.f32 %v1320, %v674
    %v1325 = vadd.f32 %v1321, %v676
    %v1326 = vadd.f32 %v1322, %v1312
    %v1327 = vadd.f32 %v1323, %v1314
    %v1328 = vmul.f32 %v653, %v653
    %v1329 = vmul.f32 %v655, %v655
    %v1330 = vmul.f32 %v1291, %v1291
    %v1331 = vmul.f32 %v1293, %v1293
    %v1332 = vmul.f32 %v660, %v660
    %v1333 = vmul.f32 %v662, %v662
    %v1334 = vmul.f32 %v1298, %v1298
    %v1335 = vmul.f32 %v1300, %v1300
    %v1336 = vadd.f32 %v1328, %v1332
    %v1337 = vadd.f32 %v1329, %v1333
    %v1338 = vadd.f32 %v1330, %v1334
    %v1339 = vadd.f32 %v1331, %v1335
    %v1340 = vmul.f32 %v667, %v667
    %v1341 = vmul.f32 %v669, %v669
    %v1342 = vmul.f32 %v1305, %v1305
    %v1343 = vmul.f32 %v1307, %v1307
    %v1344 = vadd.f32 %v1336, %v1340
    %v1345 = vadd.f32 %v1337, %v1341
    %v1346 = vadd.f32 %v1338, %v1342
    %v1347 = vadd.f32 %v1339, %v1343
    %v1348 = vmul.f32 %v674, %v674
    %v1349 = vmul.f32 %v676, %v676
    %v1350 = vmul.f32 %v1312, %v1312
    %v1351 = vmul.f32 %v1314, %v1314
    %v1352 = vadd.f32 %v1344, %v1348
    %v1353 = vadd.f32 %v1345, %v1349
    %v1354 = vadd.f32 %v1346, %v1350
    %v1355 = vadd.f32 %v1347, %v1351
    %v1356 = vadd.f32 %v1324, %v1325
    %v1357 = vadd.f32 %v1356, %v1326
    %v1358 = vadd.f32 %v1357, %v1327
    %1359 = vadd.xlane.f32.xlu0 %v1358
    %v1360 = vpop.xlane.xlu0 %1359
    %v1361 = vmul.f32 %v1360, 0.00048828125
    %v1362 = vadd.f32 %v1352, %v1353
    %v1363 = vadd.f32 %v1362, %v1354
    %v1364 = vadd.f32 %v1363, %v1355
    %1365 = vadd.xlane.f32.xlu0 %v1364
    %v1366 = vpop.xlane.xlu0 %1365
    %v1367 = vmul.f32 %v1366, 0.00048828125
    %v1368 = vmul.f32 %v1361, %v1361
    %v1369 = vsub.f32 %v1367, %v1368
    %v1370 = vadd.f32 %v1369, 1e-05
    %v1371 = vrsqrt.pop %v1370
    %v1372 = vld [vmem:[%s2] sm:$0xff]
    %v1373 = vmul.f32 %v1372, %v1371
    %v1374 = vld [vmem:[%s2 + $0x8] sm:$0xff]
    %v1375 = vmul.f32 %v1361, %v1373
    %v1376 = vsub.f32 %v1374, %v1375
    %1378 = vset.pattern.permute.xlu0 0
    %1379 = vperm.xlu0 %1378, %v1373
    %v1380 = vpop.permute.xlu0 %1379
    %v1382 = vmul.f32 %v653, %v1380
    %v1383 = vmul.f32 %v655, %v1380
    %v1384 = vmul.f32 %v1291, %v1380
    %v1385 = vmul.f32 %v1293, %v1380
    %1387 = vset.pattern.permute.xlu0 0
    %1388 = vperm.xlu0 %1387, %v1376
    %v1389 = vpop.permute.xlu0 %1388
    %v1391 = vadd.f32 %v1382, %v1389
    %v1392 = vadd.f32 %v1383, %v1389
    %v1393 = vadd.f32 %v1384, %v1389
    %v1394 = vadd.f32 %v1385, %v1389
    %v1395 = vmax.f32 %v1391, 0.0
    %v1396 = vmax.f32 %v1392, 0.0
    %v1397 = vmax.f32 %v1393, 0.0
    %v1398 = vmax.f32 %v1394, 0.0
    %1399 = vst [vmem:[#allocation2] sm:$0xff] %v1395
    %1400 = vst [vmem:[#allocation2 + $0x8] sm:$0xff] %v1396
    %1401 = vst [vmem:[#allocation2 + $0x10] sm:$0xff] %v1397
    %1402 = vst [vmem:[#allocation2 + $0x18] sm:$0xff] %v1398
    %v1403 = vmul.f32 %v660, %v1380
    %v1404 = vmul.f32 %v662, %v1380
    %v1405 = vmul.f32 %v1298, %v1380
    %v1406 = vmul.f32 %v1300, %v1380
    %v1407 = vadd.f32 %v1403, %v1389
    %v1408 = vadd.f32 %v1404, %v1389
    %v1409 = vadd.f32 %v1405, %v1389
    %v1410 = vadd.f32 %v1406, %v1389
    %v1411 = vmax.f32 %v1407, 0.0
    %v1412 = vmax.f32 %v1408, 0.0
    %v1413 = vmax.f32 %v1409, 0.0
    %v1414 = vmax.f32 %v1410, 0.0
    %1415 = vst [vmem:[#allocation2 + $0x20] sm:$0xff] %v1411
    %1416 = vst [vmem:[#allocation2 + $0x28] sm:$0xff] %v1412
    %1417 = vst [vmem:[#allocation2 + $0x30] sm:$0xff] %v1413
    %1418 = vst [vmem:[#allocation2 + $0x38] sm:$0xff] %v1414
    %v1419 = vmul.f32 %v667, %v1380
    %v1420 = vmul.f32 %v669, %v1380
    %v1421 = vmul.f32 %v1305, %v1380
    %v1422 = vmul.f32 %v1307, %v1380
    %v1423 = vadd.f32 %v1419, %v1389
    %v1424 = vadd.f32 %v1420, %v1389
    %v1425 = vadd.f32 %v1421, %v1389
    %v1426 = vadd.f32 %v1422, %v1389
    %v1427 = vmax.f32 %v1423, 0.0
    %v1428 = vmax.f32 %v1424, 0.0
    %v1429 = vmax.f32 %v1425, 0.0
    %v1430 = vmax.f32 %v1426, 0.0
    %1431 = vst [vmem:[#allocation2 + $0x40] sm:$0xff] %v1427
    %1432 = vst [vmem:[#allocation2 + $0x48] sm:$0xff] %v1428
    %1433 = vst [vmem:[#allocation2 + $0x50] sm:$0xff] %v1429
    %1434 = vst [vmem:[#allocation2 + $0x58] sm:$0xff] %v1430
    %v1435 = vmul.f32 %v674, %v1380
    %v1436 = vmul.f32 %v676, %v1380
    %v1437 = vmul.f32 %v1312, %v1380
    %v1438 = vmul.f32 %v1314, %v1380
    %v1439 = vadd.f32 %v1435, %v1389
    %v1440 = vadd.f32 %v1436, %v1389
    %v1441 = vadd.f32 %v1437, %v1389
    %v1442 = vadd.f32 %v1438, %v1389
    %v1443 = vmax.f32 %v1439, 0.0
    %v1444 = vmax.f32 %v1440, 0.0
    %v1445 = vmax.f32 %v1441, 0.0
    %v1446 = vmax.f32 %v1442, 0.0
    %1447 = vst [vmem:[#allocation2 + $0x60] sm:$0xff] %v1443
    %1448 = vst [vmem:[#allocation2 + $0x68] sm:$0xff] %v1444
    %1449 = vst [vmem:[#allocation2 + $0x70] sm:$0xff] %v1445
    %1450 = vst [vmem:[#allocation2 + $0x78] sm:$0xff] %v1446
    // Predicated region
    $region14: #{tpu_custom_call.1} parent=1 // pred_check
      _
    $region15: #{tpu_custom_call.1} parent=1 // pred_check_branch
      %1452 = sbr.rel (0) target = $region17
    $region16: #{tpu_custom_call.1} parent=1 // pred_region
      %s1454 = ssub.s32 2048, 2048
      %1455 = vsyncadd [#allocation3], %s1454
      %s1456 = sshll.u32 [#allocation2], 4
      %s1457 = int_to_ptr.vmem [resolvable:$true] %s1456
      %1462 = dma.vmem_to_hbm [thread:$0]  %s1457, 2048, %s3, [#allocation3], 512, 512, 32
    $region17: #{tpu_custom_call.1} parent=1 // pred_fallthru
      _
    // Predicated region
    $region18: #{tpu_custom_call.1} parent=1 // pred_check
      _
    $region19: #{tpu_custom_call.1} parent=1 // pred_check_branch
      %1464 = sbr.rel (0) target = $region21
    $region20: #{tpu_custom_call.1} parent=1 // pred_region
      %1465 = dma.done [#allocation3], 2048
    $region21: #{tpu_custom_call.1} parent=1 // pred_fallthru
      _
    %1466 = vsyncpa [#allocation3], 1

</llo_original>
